<compile_context>
chip_gen: v7x
topology: tpu7x:2x2x1
jax: 0.10.0
libtpu: 0.0.40
codegen_flags: <defaults>
</compile_context>

<pallas_src>
import functools

import jax
import jax.numpy as jnp
from jax.experimental import pallas as pl
from jax.experimental.pallas import tpu as pltpu

BN_EPS = 1e-5
LANE = 128
SUBLANE = 8


def _round_up(n, m):
    return ((n + m - 1) // m) * m


def _pad2d(a, rows, cols):
    return jnp.pad(a, ((0, rows - a.shape[0]), (0, cols - a.shape[1])))


def _device_kind():
    try:
        return jax.devices()[0].device_kind.lower()
    except Exception:
        return ""


# ---------------------------------------------------------------------------
# Fused Pallas kernel: all MLP layers for one row tile, everything in VMEM.
# Ref order: x, then per layer (w, b[, bn_scale]), then out.
# ---------------------------------------------------------------------------
def _fused_mlp_kernel(num_layers, act_flags, scale_flags, negative_slope,
                      compute_dtype, *refs):
    x_ref = refs[0]
    out_ref = refs[-1]
    p = refs[1:-1]

    h = x_ref[...]
    idx = 0
    for i in range(num_layers):
        w = p[idx][...]; idx += 1                  # already compute_dtype (pre-cast in wrapper)
        b = p[idx][...]; idx += 1                  # f32 (1, N)
        acc = jnp.dot(h.astype(compute_dtype), w,
                      preferred_element_type=jnp.float32)
        if scale_flags[i]:                         # eval-mode BN scale, applied in f32
            s = p[idx][...]; idx += 1
            acc = acc * s
        h = acc + b
        if act_flags[i]:
            if negative_slope == 0.0:              # ReLU
                h = jnp.maximum(h, 0.0)
            elif negative_slope != 1.0:            # slope 1.0 == identity -> skip
                h = jnp.where(h > 0, h, negative_slope * h)
    out_ref[...] = h.astype(out_ref.dtype)


# ---------------------------------------------------------------------------
# Wrapper: BN folding, padding, VMEM budgeting, single fused pallas_call.
# ---------------------------------------------------------------------------
def mlp_forward(x, params, *, bn=False, end_up_with_fc=False, act='ReLU',
                bias=True, row_tile=512, use_bf16=True, out_dtype=None):
    """Eval-mode forward of the reference MLP as one fused Pallas kernel."""
    orig_dtype = x.dtype
    x = x.astype(jnp.float32)
    n, d_in = x.shape
    num_layers = len(params['layers'])
    out_dtype = jnp.dtype(out_dtype) if out_dtype is not None else jnp.dtype(orig_dtype)
    compute_dtype = jnp.bfloat16 if use_bf16 else jnp.float32

    # Activation quirk of the reference: getattr(torch.nn, act)(True)
    #   ReLU(True)      -> inplace ReLU (standard relu)
    #   LeakyReLU(True) -> negative_slope == True == 1.0 (identity)
    if act == 'ReLU':
        negative_slope = 0.0
    elif act == 'LeakyReLU':
        negative_slope = 1.0
    else:
        raise NotImplementedError(f"act={act!r} not supported")
    act_flags = tuple(not end_up_with_fc for _ in range(num_layers))
    fold_bn = bn and not end_up_with_fc
    # With bf16 weights keep the BN scale OUT of W (apply post-matmul in f32).
    scale_flags = tuple(fold_bn and use_bf16 for _ in range(num_layers))

    # Feature padding: lane-dense (128); 256 on v6e/v7x when padding cost <~25%.
    kind = _device_kind()
    align256 = ('v6' in kind) or ('v7' in kind)

    def feat_pad(d):
        p128 = _round_up(max(d, 1), LANE)
        if align256:
            p256 = _round_up(max(d, 1), 256)
            if p256 <= 1.25 * p128:
                return p256
        return p128

    dims = [d_in] + [lp['w'].shape[1] for lp in params['layers']]
    d_pads = [feat_pad(d) for d in dims]

    # Fold / pad / pre-cast parameters (order must match spec construction below).
    flat_params = []
    for i, lp in enumerate(params['layers']):
        W = lp['w'].astype(jnp.float32)
        if bias and lp.get('b') is not None:
            b = lp['b'].astype(jnp.float32)
        else:
            b = jnp.zeros((W.shape[1],), jnp.float32)
        s = None
        if fold_bn:
            scale = lp['gamma'].astype(jnp.float32) * jax.lax.rsqrt(
                lp['var'].astype(jnp.float32) + BN_EPS)
            b = (b - lp['mean'].astype(jnp.float32)) * scale + lp['beta'].astype(jnp.float32)
            if scale_flags[i]:
                s = scale                              # applied post-matmul in f32
            else:
                W = W * scale[None, :]                 # exact fold in f32
        Wp = _pad2d(W, d_pads[i], d_pads[i + 1]).astype(compute_dtype)   # wrapper-side cast
        bp = _pad2d(b.reshape(1, -1), 1, d_pads[i + 1])                  # f32
        flat_params.extend([Wp, bp])
        if scale_flags[i]:
            flat_params.append(_pad2d(s.reshape(1, -1), 1, d_pads[i + 1]))

    # ---- Resident-footprint accounting -> row tile + vmem_limit_bytes ----
    wbytes = jnp.dtype(compute_dtype).itemsize
    obytes = jnp.dtype(out_dtype).itemsize
    weight_bufs = 2   # conservative: assume double buffering if Buffered(1) is rejected
    resident = weight_bufs * sum(
        d_pads[i] * d_pads[i + 1] * wbytes for i in range(num_layers))
    resident += weight_bufs * sum(d_pads[1:]) * 4 * 2    # bias (+ optional scale) rows
    max_d = max(d_pads)

    def act_bytes(t):
        io = 2 * t * (d_pads[0] * 4 + d_pads[-1] * obytes)   # double-buffered x / out tiles
        inter = 2 * t * max_d * 4                            # headroom for intermediates
        return io + inter

    row_tile = max(SUBLANE, _round_up(row_tile, SUBLANE))
    tm = row_tile if n > row_tile else _round_up(max(n, SUBLANE), SUBLANE)
    budget = 48 << 20        # stays inside v7x's 64 MiB physical VMEM with headroom
    while tm > SUBLANE and resident + act_bytes(tm) > budget:
        tm = _round_up(max(tm // 2, SUBLANE), SUBLANE)

    num_tiles = -(-n // tm)
    if num_tiles > 1 and num_tiles % 2:   # even tile count keeps both v7x TCs busy
        num_tiles += 1
        tm = _round_up(-(-n // num_tiles), SUBLANE)
        num_tiles = -(-n // tm)
        if num_tiles % 2:
            num_tiles += 1
    n_pad = tm * num_tiles
    x_p = _pad2d(x, n_pad, d_pads[0])

    phys_vmem = (64 << 20) if 'v7' in kind else (128 << 20)
    vmem_limit = int(min(max(resident + act_bytes(tm) + (8 << 20), 32 << 20),
                         phys_vmem - (16 << 20)))

    flops = 2 * n_pad * sum(d_pads[i] * d_pads[i + 1] for i in range(num_layers))
    bytes_accessed = (x_p.size * 4
                      + sum(int(a.size) * a.dtype.itemsize for a in flat_params)
                      + n_pad * d_pads[-1] * obytes)
    try:
        cost = pl.CostEstimate(flops=flops, transcendentals=0,
                               bytes_accessed=bytes_accessed)
    except Exception:
        cost = None

    kernel = functools.partial(_fused_mlp_kernel, num_layers, act_flags,
                               scale_flags, negative_slope, compute_dtype)

    def build_specs(weight_mode):
        wkw = {} if weight_mode is None else {'pipeline_mode': weight_mode}
        specs = [pl.BlockSpec((tm, d_pads[0]), lambda i: (i, 0))]
        for li in range(num_layers):
            specs.append(pl.BlockSpec((d_pads[li], d_pads[li + 1]),
                                      lambda i: (0, 0), **wkw))
            specs.append(pl.BlockSpec((1, d_pads[li + 1]), lambda i: (0, 0), **wkw))
            if scale_flags[li]:
                specs.append(pl.BlockSpec((1, d_pads[li + 1]), lambda i: (0, 0), **wkw))
        return specs

    def call(weight_mode):
        return pl.pallas_call(
            kernel,
            out_shape=jax.ShapeDtypeStruct((n_pad, d_pads[-1]), out_dtype),
            grid=(num_tiles,),
            in_specs=build_specs(weight_mode),
            out_specs=pl.BlockSpec((tm, d_pads[-1]), lambda i: (i, 0)),
            compiler_params=pltpu.CompilerParams(
                dimension_semantics=("parallel",),      # shard row tiles across TCs (v7x)
                vmem_limit_bytes=vmem_limit),
            cost_estimate=cost,
        )(x_p, *flat_params)

    try:
        # Constant index_map -> resident weights only need a single VMEM buffer.
        out_p = call(pl.Buffered(1))
    except Exception:
        out_p = call(None)

    return out_p[:n, :dims[-1]]


# ---------------------------------------------------------------------------
# Parameter init (mirrors nn.Linear defaults; BN running stats for eval mode)
# and a pure-JAX reference for correctness checking.
# ---------------------------------------------------------------------------
def init_mlp_params(key, input_dim, hidden_dim, embed_dim, num_layers, *,
                    bn=False, bias=True):
    layers = []
    keys = jax.random.split(key, num_layers * 6)
    for i in range(num_layers):
        d_in = input_dim if i == 0 else hidden_dim
        d_out = embed_dim if i == num_layers - 1 else hidden_dim
        k = keys[6 * i:6 * (i + 1)]
        limit = 1.0 / (d_in ** 0.5)
        layer = {
            'w': jax.random.uniform(k[0], (d_in, d_out), jnp.float32, -limit, limit),
            'b': (jax.random.uniform(k[1], (d_out,), jnp.float32, -limit, limit)
                  if bias else None),
        }
        if bn:
            layer.update(
                gamma=1.0 + 0.1 * jax.random.normal(k[2], (d_out,), jnp.float32),
                beta=0.1 * jax.random.normal(k[3], (d_out,), jnp.float32),
                mean=0.1 * jax.random.normal(k[4], (d_out,), jnp.float32),
                var=1.0 + 0.2 * jax.random.uniform(k[5], (d_out,), jnp.float32),
            )
        layers.append(layer)
    return {'layers': layers}


def mlp_reference(x, params, *, bn=False, end_up_with_fc=False, act='ReLU', bias=True):
    h = x.astype(jnp.float32)
    slope = 0.0 if act == 'ReLU' else 1.0
    for lp in params['layers']:
        W = lp['w']
        b = lp['b'] if (bias and lp.get('b') is not None) else 0.0
        h = jnp.dot(h, W, precision=jax.lax.Precision.HIGHEST) + b
        if not end_up_with_fc:
            if bn:
                h = ((h - lp['mean']) * jax.lax.rsqrt(lp['var'] + BN_EPS)
                     * lp['gamma'] + lp['beta'])
            if slope == 0.0:
                h = jnp.maximum(h, 0.0)
            elif slope != 1.0:
                h = jnp.where(h > 0, h, slope * h)
    return h


# ---------------------------------------------------------------------------
if __name__ == "__main__":
    key = jax.random.PRNGKey(0)
    k_x, k_p1, k_p2 = jax.random.split(key, 3)

    input_dim, hidden_dim, embed_dim, num_layers = 16, 32, 8, 3
    batch = 300

    x = jax.random.normal(k_x, (batch, input_dim), jnp.float32)
    p1 = init_mlp_params(k_p1, input_dim, hidden_dim, embed_dim, num_layers, bn=False)
    p2 = init_mlp_params(k_p2, input_dim, hidden_dim, embed_dim, num_layers, bn=True)

    # 1) Production default path: bf16 MXU weights, single row tile.
    out1 = jax.block_until_ready(mlp_forward(x, p1))
    ref1 = mlp_reference(x, p1)
    assert out1.shape == (batch, embed_dim), out1.shape
    assert bool(jnp.allclose(out1, ref1, atol=1e-1, rtol=1e-1))   # bf16 quantization tol

    # 2) bf16 + eval-mode BN (scale applied post-matmul in f32, shift folded into bias).
    out2 = jax.block_until_ready(mlp_forward(x, p2, bn=True))
    ref2 = mlp_reference(x, p2, bn=True)
    assert out2.shape == (batch, embed_dim), out2.shape
    assert bool(jnp.allclose(out2, ref2, atol=1e-1, rtol=1e-1))

    # 3) f32 path (tight tolerance), BN folded into weights, forced multi-tile grid
    #    (300 rows @ row_tile=128 -> 4 even row tiles of 80).
    out3 = jax.block_until_ready(mlp_forward(x, p2, bn=True, use_bf16=False, row_tile=128))
    assert out3.shape == (batch, embed_dim), out3.shape
    assert bool(jnp.allclose(out3, ref2, atol=5e-3, rtol=5e-3))

    # 4) end_up_with_fc=True: per the reference, NO BN / activation on any layer.
    out4 = jax.block_until_ready(mlp_forward(x, p1, end_up_with_fc=True, use_bf16=False))
    ref4 = mlp_reference(x, p1, end_up_with_fc=True)
    assert out4.shape == (batch, embed_dim), out4.shape
    assert bool(jnp.allclose(out4, ref4, atol=5e-3, rtol=5e-3))

    print("KERNEL_OK")
</pallas_src>

<mosaic_0001>
module attributes {stable_mosaic.version = 11 : i64} {
  func.func @_fused_mlp_kernel(%arg0: i32, %arg1: memref<304x128xf32, #tpu.memory_space<vmem>>, %arg2: memref<128x128xbf16, #tpu.memory_space<vmem>>, %arg3: memref<1x128xf32, #tpu.memory_space<vmem>>, %arg4: memref<128x128xbf16, #tpu.memory_space<vmem>>, %arg5: memref<1x128xf32, #tpu.memory_space<vmem>>, %arg6: memref<128x128xbf16, #tpu.memory_space<vmem>>, %arg7: memref<1x128xf32, #tpu.memory_space<vmem>>, %arg8: memref<304x128xf32, #tpu.memory_space<vmem>>) attributes {dimension_semantics = [#tpu.dimension_semantics<parallel>], iteration_bounds = array<i64: 1>, scalar_prefetch = 0 : i64, scratch_operands = 0 : i64, tpu.core_type = #tpu.core_type<tc>, window_params = [{transform_indices = @transform_0, window_bounds = array<i64: 304, 128>}, {pipeline_mode = #tpu.pipeline_mode<synchronous>, transform_indices = @transform_1, window_bounds = array<i64: 128, 128>}, {pipeline_mode = #tpu.pipeline_mode<synchronous>, transform_indices = @transform_2, window_bounds = array<i64: 1, 128>}, {pipeline_mode = #tpu.pipeline_mode<synchronous>, transform_indices = @transform_3, window_bounds = array<i64: 128, 128>}, {pipeline_mode = #tpu.pipeline_mode<synchronous>, transform_indices = @transform_4, window_bounds = array<i64: 1, 128>}, {pipeline_mode = #tpu.pipeline_mode<synchronous>, transform_indices = @transform_5, window_bounds = array<i64: 128, 128>}, {pipeline_mode = #tpu.pipeline_mode<synchronous>, transform_indices = @transform_6, window_bounds = array<i64: 1, 128>}, {transform_indices = @transform_7, window_bounds = array<i64: 304, 128>}]} {
    %c0 = arith.constant 0 : index
    %c0_0 = arith.constant 0 : index
    %0 = vector.load %arg1[%c0, %c0_0] : memref<304x128xf32, #tpu.memory_space<vmem>>, vector<304x128xf32>
    %c0_1 = arith.constant 0 : index
    %c0_2 = arith.constant 0 : index
    %1 = vector.load %arg2[%c0_1, %c0_2] : memref<128x128xbf16, #tpu.memory_space<vmem>>, vector<128x128xbf16>
    %c0_3 = arith.constant 0 : index
    %c0_4 = arith.constant 0 : index
    %2 = vector.load %arg3[%c0_3, %c0_4] : memref<1x128xf32, #tpu.memory_space<vmem>>, vector<1x128xf32>
    %3 = arith.truncf %0 : vector<304x128xf32> to vector<304x128xbf16>
    %cst = arith.constant dense<0.000000e+00> : vector<304x128xf32>
    %4 = tpu.matmul %3, %1, %cst {dimension_numbers = #tpu.dot_dimension_numbers<[1], [0], [0], [1], [0, 0, 1, 1], [], []>} : vector<304x128xbf16>, vector<128x128xbf16>, vector<304x128xf32> -> vector<304x128xf32>
    %5 = vector.broadcast %2 : vector<1x128xf32> to vector<304x128xf32>
    %6 = arith.addf %4, %5 : vector<304x128xf32>
    %cst_5 = arith.constant 0.000000e+00 : f32
    %7 = vector.broadcast %cst_5 : f32 to vector<304x128xf32>
    %8 = arith.maximumf %6, %7 : vector<304x128xf32>
    %c0_6 = arith.constant 0 : index
    %c0_7 = arith.constant 0 : index
    %9 = vector.load %arg4[%c0_6, %c0_7] : memref<128x128xbf16, #tpu.memory_space<vmem>>, vector<128x128xbf16>
    %c0_8 = arith.constant 0 : index
    %c0_9 = arith.constant 0 : index
    %10 = vector.load %arg5[%c0_8, %c0_9] : memref<1x128xf32, #tpu.memory_space<vmem>>, vector<1x128xf32>
    %11 = arith.truncf %8 : vector<304x128xf32> to vector<304x128xbf16>
    %cst_10 = arith.constant dense<0.000000e+00> : vector<304x128xf32>
    %12 = tpu.matmul %11, %9, %cst_10 {dimension_numbers = #tpu.dot_dimension_numbers<[1], [0], [0], [1], [0, 0, 1, 1], [], []>} : vector<304x128xbf16>, vector<128x128xbf16>, vector<304x128xf32> -> vector<304x128xf32>
    %13 = vector.broadcast %10 : vector<1x128xf32> to vector<304x128xf32>
    %14 = arith.addf %12, %13 : vector<304x128xf32>
    %cst_11 = arith.constant 0.000000e+00 : f32
    %15 = vector.broadcast %cst_11 : f32 to vector<304x128xf32>
    %16 = arith.maximumf %14, %15 : vector<304x128xf32>
    %c0_12 = arith.constant 0 : index
    %c0_13 = arith.constant 0 : index
    %17 = vector.load %arg6[%c0_12, %c0_13] : memref<128x128xbf16, #tpu.memory_space<vmem>>, vector<128x128xbf16>
    %c0_14 = arith.constant 0 : index
    %c0_15 = arith.constant 0 : index
    %18 = vector.load %arg7[%c0_14, %c0_15] : memref<1x128xf32, #tpu.memory_space<vmem>>, vector<1x128xf32>
    %19 = arith.truncf %16 : vector<304x128xf32> to vector<304x128xbf16>
    %cst_16 = arith.constant dense<0.000000e+00> : vector<304x128xf32>
    %20 = tpu.matmul %19, %17, %cst_16 {dimension_numbers = #tpu.dot_dimension_numbers<[1], [0], [0], [1], [0, 0, 1, 1], [], []>} : vector<304x128xbf16>, vector<128x128xbf16>, vector<304x128xf32> -> vector<304x128xf32>
    %21 = vector.broadcast %18 : vector<1x128xf32> to vector<304x128xf32>
    %22 = arith.addf %20, %21 : vector<304x128xf32>
    %cst_17 = arith.constant 0.000000e+00 : f32
    %23 = vector.broadcast %cst_17 : f32 to vector<304x128xf32>
    %24 = arith.maximumf %22, %23 : vector<304x128xf32>
    %c0_18 = arith.constant 0 : index
    %c0_19 = arith.constant 0 : index
    %25 = vector.load %arg8[%c0_18, %c0_19] : memref<304x128xf32, #tpu.memory_space<vmem>>, vector<304x128xf32>
    tpu.vector_store %arg8[%c0_18, %c0_19], %24 {strides = array<i32>} : memref<304x128xf32, #tpu.memory_space<vmem>>, vector<304x128xf32>,
    return
  }
  func.func @transform_0(%arg0: i32) -> (i32, i32) {
    %c0_i32 = arith.constant 0 : i32
    %c0_i32_0 = arith.constant 0 : i32
    return %arg0, %c0_i32 : i32, i32
  }
  func.func @transform_1(%arg0: i32) -> (i32, i32) {
    %c0_i32 = arith.constant 0 : i32
    %c0_i32_0 = arith.constant 0 : i32
    %c0_i32_1 = arith.constant 0 : i32
    return %c0_i32, %c0_i32_0 : i32, i32
  }
  func.func @transform_2(%arg0: i32) -> (i32, i32) {
    %c0_i32 = arith.constant 0 : i32
    %c0_i32_0 = arith.constant 0 : i32
    %c0_i32_1 = arith.constant 0 : i32
    return %c0_i32, %c0_i32_0 : i32, i32
  }
  func.func @transform_3(%arg0: i32) -> (i32, i32) {
    %c0_i32 = arith.constant 0 : i32
    %c0_i32_0 = arith.constant 0 : i32
    %c0_i32_1 = arith.constant 0 : i32
    return %c0_i32, %c0_i32_0 : i32, i32
  }
  func.func @transform_4(%arg0: i32) -> (i32, i32) {
    %c0_i32 = arith.constant 0 : i32
    %c0_i32_0 = arith.constant 0 : i32
    %c0_i32_1 = arith.constant 0 : i32
    return %c0_i32, %c0_i32_0 : i32, i32
  }
  func.func @transform_5(%arg0: i32) -> (i32, i32) {
    %c0_i32 = arith.constant 0 : i32
    %c0_i32_0 = arith.constant 0 : i32
    %c0_i32_1 = arith.constant 0 : i32
    return %c0_i32, %c0_i32_0 : i32, i32
  }
  func.func @transform_6(%arg0: i32) -> (i32, i32) {
    %c0_i32 = arith.constant 0 : i32
    %c0_i32_0 = arith.constant 0 : i32
    %c0_i32_1 = arith.constant 0 : i32
    return %c0_i32, %c0_i32_0 : i32, i32
  }
  func.func @transform_7(%arg0: i32) -> (i32, i32) {
    %c0_i32 = arith.constant 0 : i32
    %c0_i32_0 = arith.constant 0 : i32
    return %arg0, %c0_i32 : i32, i32
  }
}

module attributes {stable_mosaic.version = 11 : i64} {
  func.func @_fused_mlp_kernel(%arg0: i32, %arg1: memref<304x128xf32, #tpu.memory_space<vmem>>, %arg2: memref<128x128xbf16, #tpu.memory_space<vmem>>, %arg3: memref<1x128xf32, #tpu.memory_space<vmem>>, %arg4: memref<128x128xbf16, #tpu.memory_space<vmem>>, %arg5: memref<1x128xf32, #tpu.memory_space<vmem>>, %arg6: memref<128x128xbf16, #tpu.memory_space<vmem>>, %arg7: memref<1x128xf32, #tpu.memory_space<vmem>>, %arg8: memref<304x128xf32, #tpu.memory_space<vmem>>) attributes {dimension_semantics = [#tpu.dimension_semantics<parallel>], iteration_bounds = array<i64: 1>, scalar_prefetch = 0 : i64, scratch_operands = 0 : i64, tpu.core_type = #tpu.core_type<tc>, window_params = [{transform_indices = @transform_0, window_bounds = array<i64: 304, 128>}, {pipeline_mode = #tpu.pipeline_mode<synchronous>, transform_indices = @transform_1, window_bounds = array<i64: 128, 128>}, {pipeline_mode = #tpu.pipeline_mode<synchronous>, transform_indices = @transform_2, window_bounds = array<i64: 1, 128>}, {pipeline_mode = #tpu.pipeline_mode<synchronous>, transform_indices = @transform_3, window_bounds = array<i64: 128, 128>}, {pipeline_mode = #tpu.pipeline_mode<synchronous>, transform_indices = @transform_4, window_bounds = array<i64: 1, 128>}, {pipeline_mode = #tpu.pipeline_mode<synchronous>, transform_indices = @transform_5, window_bounds = array<i64: 128, 128>}, {pipeline_mode = #tpu.pipeline_mode<synchronous>, transform_indices = @transform_6, window_bounds = array<i64: 1, 128>}, {transform_indices = @transform_7, window_bounds = array<i64: 304, 128>}]} {
    %c0 = arith.constant 0 : index
    %c0_0 = arith.constant 0 : index
    %0 = vector.load %arg1[%c0, %c0_0] : memref<304x128xf32, #tpu.memory_space<vmem>>, vector<304x128xf32>
    %c0_1 = arith.constant 0 : index
    %c0_2 = arith.constant 0 : index
    %1 = vector.load %arg2[%c0_1, %c0_2] : memref<128x128xbf16, #tpu.memory_space<vmem>>, vector<128x128xbf16>
    %c0_3 = arith.constant 0 : index
    %c0_4 = arith.constant 0 : index
    %2 = vector.load %arg3[%c0_3, %c0_4] : memref<1x128xf32, #tpu.memory_space<vmem>>, vector<1x128xf32>
    %3 = arith.truncf %0 : vector<304x128xf32> to vector<304x128xbf16>
    %cst = arith.constant dense<0.000000e+00> : vector<304x128xf32>
    %4 = tpu.matmul %3, %1, %cst {dimension_numbers = #tpu.dot_dimension_numbers<[1], [0], [0], [1], [0, 0, 1, 1], [], []>} : vector<304x128xbf16>, vector<128x128xbf16>, vector<304x128xf32> -> vector<304x128xf32>
    %5 = vector.broadcast %2 : vector<1x128xf32> to vector<304x128xf32>
    %6 = arith.addf %4, %5 : vector<304x128xf32>
    %cst_5 = arith.constant 0.000000e+00 : f32
    %7 = vector.broadcast %cst_5 : f32 to vector<304x128xf32>
    %8 = arith.maximumf %6, %7 : vector<304x128xf32>
    %c0_6 = arith.constant 0 : index
    %c0_7 = arith.constant 0 : index
    %9 = vector.load %arg4[%c0_6, %c0_7] : memref<128x128xbf16, #tpu.memory_space<vmem>>, vector<128x128xbf16>
    %c0_8 = arith.constant 0 : index
    %c0_9 = arith.constant 0 : index
    %10 = vector.load %arg5[%c0_8, %c0_9] : memref<1x128xf32, #tpu.memory_space<vmem>>, vector<1x128xf32>
    %11 = arith.truncf %8 : vector<304x128xf32> to vector<304x128xbf16>
    %cst_10 = arith.constant dense<0.000000e+00> : vector<304x128xf32>
    %12 = tpu.matmul %11, %9, %cst_10 {dimension_numbers = #tpu.dot_dimension_numbers<[1], [0], [0], [1], [0, 0, 1, 1], [], []>} : vector<304x128xbf16>, vector<128x128xbf16>, vector<304x128xf32> -> vector<304x128xf32>
    %13 = vector.broadcast %10 : vector<1x128xf32> to vector<304x128xf32>
    %14 = arith.addf %12, %13 : vector<304x128xf32>
    %cst_11 = arith.constant 0.000000e+00 : f32
    %15 = vector.broadcast %cst_11 : f32 to vector<304x128xf32>
    %16 = arith.maximumf %14, %15 : vector<304x128xf32>
    %c0_12 = arith.constant 0 : index
    %c0_13 = arith.constant 0 : index
    %17 = vector.load %arg6[%c0_12, %c0_13] : memref<128x128xbf16, #tpu.memory_space<vmem>>, vector<128x128xbf16>
    %c0_14 = arith.constant 0 : index
    %c0_15 = arith.constant 0 : index
    %18 = vector.load %arg7[%c0_14, %c0_15] : memref<1x128xf32, #tpu.memory_space<vmem>>, vector<1x128xf32>
    %19 = arith.truncf %16 : vector<304x128xf32> to vector<304x128xbf16>
    %cst_16 = arith.constant dense<0.000000e+00> : vector<304x128xf32>
    %20 = tpu.matmul %19, %17, %cst_16 {dimension_numbers = #tpu.dot_dimension_numbers<[1], [0], [0], [1], [0, 0, 1, 1], [], []>} : vector<304x128xbf16>, vector<128x128xbf16>, vector<304x128xf32> -> vector<304x128xf32>
    %21 = vector.broadcast %18 : vector<1x128xf32> to vector<304x128xf32>
    %22 = arith.addf %20, %21 : vector<304x128xf32>
    %cst_17 = arith.constant 0.000000e+00 : f32
    %23 = vector.broadcast %cst_17 : f32 to vector<304x128xf32>
    %24 = arith.maximumf %22, %23 : vector<304x128xf32>
    %c0_18 = arith.constant 0 : index
    %c0_19 = arith.constant 0 : index
    %25 = vector.load %arg8[%c0_18, %c0_19] : memref<304x128xf32, #tpu.memory_space<vmem>>, vector<304x128xf32>
    tpu.vector_store %arg8[%c0_18, %c0_19], %24 {strides = array<i32>} : memref<304x128xf32, #tpu.memory_space<vmem>>, vector<304x128xf32>,
    return
  }
  func.func @transform_0(%arg0: i32) -> (i32, i32) {
    %c0_i32 = arith.constant 0 : i32
    %c0_i32_0 = arith.constant 0 : i32
    return %arg0, %c0_i32 : i32, i32
  }
  func.func @transform_1(%arg0: i32) -> (i32, i32) {
    %c0_i32 = arith.constant 0 : i32
    %c0_i32_0 = arith.constant 0 : i32
    %c0_i32_1 = arith.constant 0 : i32
    return %c0_i32, %c0_i32_0 : i32, i32
  }
  func.func @transform_2(%arg0: i32) -> (i32, i32) {
    %c0_i32 = arith.constant 0 : i32
    %c0_i32_0 = arith.constant 0 : i32
    %c0_i32_1 = arith.constant 0 : i32
    return %c0_i32, %c0_i32_0 : i32, i32
  }
  func.func @transform_3(%arg0: i32) -> (i32, i32) {
    %c0_i32 = arith.constant 0 : i32
    %c0_i32_0 = arith.constant 0 : i32
    %c0_i32_1 = arith.constant 0 : i32
    return %c0_i32, %c0_i32_0 : i32, i32
  }
  func.func @transform_4(%arg0: i32) -> (i32, i32) {
    %c0_i32 = arith.constant 0 : i32
    %c0_i32_0 = arith.constant 0 : i32
    %c0_i32_1 = arith.constant 0 : i32
    return %c0_i32, %c0_i32_0 : i32, i32
  }
  func.func @transform_5(%arg0: i32) -> (i32, i32) {
    %c0_i32 = arith.constant 0 : i32
    %c0_i32_0 = arith.constant 0 : i32
    %c0_i32_1 = arith.constant 0 : i32
    return %c0_i32, %c0_i32_0 : i32, i32
  }
  func.func @transform_6(%arg0: i32) -> (i32, i32) {
    %c0_i32 = arith.constant 0 : i32
    %c0_i32_0 = arith.constant 0 : i32
    %c0_i32_1 = arith.constant 0 : i32
    return %c0_i32, %c0_i32_0 : i32, i32
  }
  func.func @transform_7(%arg0: i32) -> (i32, i32) {
    %c0_i32 = arith.constant 0 : i32
    %c0_i32_0 = arith.constant 0 : i32
    return %arg0, %c0_i32 : i32, i32
  }
}

</mosaic_0001>

<llo_original>
// kernel: tpu_custom_call.1
$region0: #{tpu_custom_call.1}
  #allocation0 [shape = 'u32[]', space=smem, size = 0x4, offset = 0x4, fixed_abs, tag = 'smem constant byte address 0x4 - core index']
  #allocation1 [shape = 'u32[144,128]{1,0:T(1,128)}', space=vmem, size = 0x12000, scoped, tag = 'internal scratch']
  %s0 = inlined_call_operand.hbm [shape: f32[304,128], index: 0, kind: input, shape index: {}]
  %s1 = inlined_call_operand.hbm [shape: bf16[128,128], index: 1, kind: input, shape index: {}]
  %s2 = inlined_call_operand.vmem [shape: f32[1,128], index: 2, kind: input, shape index: {}]
  %s3 = inlined_call_operand.hbm [shape: bf16[128,128], index: 3, kind: input, shape index: {}]
  %s4 = inlined_call_operand.vmem [shape: f32[1,128], index: 4, kind: input, shape index: {}]
  %s5 = inlined_call_operand.hbm [shape: bf16[128,128], index: 5, kind: input, shape index: {}]
  %s6 = inlined_call_operand.vmem [shape: f32[1,128], index: 6, kind: input, shape index: {}]
  %s7 = inlined_call_operand.hbm [shape: f32[304,128], index: 7, kind: output, shape index: {}]
  %s8 = sld [smem:[#allocation0]]
  $region54: #{tpu_custom_call.1} parent=0
    _
  %s10 = ssub.s32 1, %s8
  %s11 = scalar_select 0, %s10, %s8
  $region1: #{tpu_custom_call.1} parent=0
    #allocation2 [shape = 'u8[155648]{0}', space=vmem, size = 0x26000, scoped, tag = 'input window, operand 0, single buffered']
    #allocation3 [shape = 's32[1]{0}', space=sflag, size = 0x4, scoped, tag = 'scoped memory for tpu_custom_call.1']
    #allocation4 [shape = 's32[1]{0}', space=sflag, size = 0x4, scoped, tag = 'scoped memory for tpu_custom_call.1']
    #allocation5 [shape = 'u8[32768]{0}', space=vmem, size = 0x8000, scoped, tag = 'input window, operand 1, single buffered']
    #allocation6 [shape = 's32[1]{0}', space=sflag, size = 0x4, scoped, tag = 'scoped memory for tpu_custom_call.1']
    #allocation7 [shape = 'u8[32768]{0}', space=vmem, size = 0x8000, scoped, tag = 'input window, operand 3, single buffered']
    #allocation8 [shape = 'u8[32768]{0}', space=vmem, size = 0x8000, scoped, tag = 'input window, operand 5, single buffered']
    #allocation9 [shape = 's32[1]{0}', space=sflag, size = 0x4, scoped, tag = 'scoped memory for tpu_custom_call.1']
    #allocation10 [shape = 'u8[155648]{0}', space=vmem, size = 0x26000, scoped, tag = 'output window, operand 0, single buffered']
    %12 = vsyncpa [#allocation3], 0
    %13 = vsyncpa [#allocation6], 0
    %14 = vsyncpa [#allocation9], 0
    %15 = vsyncpa [#allocation4], 0
    // Predicated region
    $region2: #{tpu_custom_call.1} parent=1 // pred_check
      _
    $region3: #{tpu_custom_call.1} parent=1 // pred_check_branch
      %17 = sbr.rel (0) target = $region5
    $region4: #{tpu_custom_call.1} parent=1 // pred_region
      %s19 = ssub.s32 4864, 4864
      %20 = vsyncadd [#allocation3], %s19
      %s21 = sshll.u32 [#allocation2], 4
      %s22 = int_to_ptr.vmem [resolvable:$true] %s21
      %27 = dma.hbm_to_vmem [thread:$0]  %s0, 4864, %s22, [#allocation3], 128, 128, 8
    $region5: #{tpu_custom_call.1} parent=1 // pred_fallthru
      _
    // Predicated region
    $region6: #{tpu_custom_call.1} parent=1 // pred_check
      _
    $region7: #{tpu_custom_call.1} parent=1 // pred_check_branch
      %29 = sbr.rel (0) target = $region9
    $region8: #{tpu_custom_call.1} parent=1 // pred_region
      %s31 = ssub.s32 1024, 1024
      %32 = vsyncadd [#allocation6], %s31
      %s33 = sshll.u32 [#allocation5], 4
      %s34 = int_to_ptr.vmem [resolvable:$true] %s33
      %39 = dma.hbm_to_vmem [thread:$0]  %s1, 1024, %s34, [#allocation6], 64, 64, 4
    $region9: #{tpu_custom_call.1} parent=1 // pred_fallthru
      _
    // Predicated region
    $region10: #{tpu_custom_call.1} parent=1 // pred_check
      _
    $region11: #{tpu_custom_call.1} parent=1 // pred_check_branch
      %41 = sbr.rel (0) target = $region13
    $region12: #{tpu_custom_call.1} parent=1 // pred_region
      _
    $region13: #{tpu_custom_call.1} parent=1 // pred_fallthru
      _
    // Predicated region
    $region14: #{tpu_custom_call.1} parent=1 // pred_check
      _
    $region15: #{tpu_custom_call.1} parent=1 // pred_check_branch
      %43 = sbr.rel (0) target = $region17
    $region16: #{tpu_custom_call.1} parent=1 // pred_region
      %s45 = ssub.s32 1024, 1024
      %46 = vsyncadd [#allocation6], %s45
      %s47 = sshll.u32 [#allocation7], 4
      %s48 = int_to_ptr.vmem [resolvable:$true] %s47
      %53 = dma.hbm_to_vmem [thread:$0]  %s3, 1024, %s48, [#allocation6], 64, 64, 4
    $region17: #{tpu_custom_call.1} parent=1 // pred_fallthru
      _
    // Predicated region
    $region18: #{tpu_custom_call.1} parent=1 // pred_check
      _
    $region19: #{tpu_custom_call.1} parent=1 // pred_check_branch
      %55 = sbr.rel (0) target = $region21
    $region20: #{tpu_custom_call.1} parent=1 // pred_region
      _
    $region21: #{tpu_custom_call.1} parent=1 // pred_fallthru
      _
    // Predicated region
    $region22: #{tpu_custom_call.1} parent=1 // pred_check
      _
    $region23: #{tpu_custom_call.1} parent=1 // pred_check_branch
      %57 = sbr.rel (0) target = $region25
    $region24: #{tpu_custom_call.1} parent=1 // pred_region
      %s59 = ssub.s32 1024, 1024
      %60 = vsyncadd [#allocation9], %s59
      %s61 = sshll.u32 [#allocation8], 4
      %s62 = int_to_ptr.vmem [resolvable:$true] %s61
      %67 = dma.hbm_to_vmem [thread:$0]  %s5, 1024, %s62, [#allocation9], 64, 64, 4
    $region25: #{tpu_custom_call.1} parent=1 // pred_fallthru
      _
    // Predicated region
    $region26: #{tpu_custom_call.1} parent=1 // pred_check
      _
    $region27: #{tpu_custom_call.1} parent=1 // pred_check_branch
      %69 = sbr.rel (0) target = $region29
    $region28: #{tpu_custom_call.1} parent=1 // pred_region
      _
    $region29: #{tpu_custom_call.1} parent=1 // pred_fallthru
      _
    // Predicated region
    $region30: #{tpu_custom_call.1} parent=1 // pred_check
      _
    $region31: #{tpu_custom_call.1} parent=1 // pred_check_branch
      %71 = sbr.rel (0) target = $region33
    $region32: #{tpu_custom_call.1} parent=1 // pred_region
      %72 = dma.done [#allocation3], 4864
    $region33: #{tpu_custom_call.1} parent=1 // pred_fallthru
      _
    // Predicated region
    $region34: #{tpu_custom_call.1} parent=1 // pred_check
      _
    $region35: #{tpu_custom_call.1} parent=1 // pred_check_branch
      %74 = sbr.rel (0) target = $region37
    $region36: #{tpu_custom_call.1} parent=1 // pred_region
      %75 = dma.done [#allocation6], 1024
    $region37: #{tpu_custom_call.1} parent=1 // pred_fallthru
      _
    // Predicated region
    $region38: #{tpu_custom_call.1} parent=1 // pred_check
      _
    $region39: #{tpu_custom_call.1} parent=1 // pred_check_branch
      %77 = sbr.rel (0) target = $region41
    $region40: #{tpu_custom_call.1} parent=1 // pred_region
      %78 = dma.done [#allocation6], 1024
    $region41: #{tpu_custom_call.1} parent=1 // pred_fallthru
      _
    // Predicated region
    $region42: #{tpu_custom_call.1} parent=1 // pred_check
      _
    $region43: #{tpu_custom_call.1} parent=1 // pred_check_branch
      %80 = sbr.rel (0) target = $region45
    $region44: #{tpu_custom_call.1} parent=1 // pred_region
      %81 = dma.done [#allocation9], 1024
    $region45: #{tpu_custom_call.1} parent=1 // pred_fallthru
      _
    %v83 = vld [vmem:[#allocation2] sm:$0xff]
    %v84 = vld [vmem:[#allocation2 + $0x8] sm:$0xff]
    %v85 = vld [vmem:[#allocation2 + $0x10] sm:$0xff]
    %v86 = vld [vmem:[#allocation2 + $0x18] sm:$0xff]
    %v87 = vld [vmem:[#allocation2 + $0x20] sm:$0xff]
    %v88 = vld [vmem:[#allocation2 + $0x28] sm:$0xff]
    %v89 = vld [vmem:[#allocation2 + $0x30] sm:$0xff]
    %v90 = vld [vmem:[#allocation2 + $0x38] sm:$0xff]
    %v91 = vld [vmem:[#allocation2 + $0x40] sm:$0xff]
    %v92 = vld [vmem:[#allocation2 + $0x48] sm:$0xff]
    %v93 = vld [vmem:[#allocation2 + $0x50] sm:$0xff]
    %v94 = vld [vmem:[#allocation2 + $0x58] sm:$0xff]
    %v95 = vld [vmem:[#allocation2 + $0x60] sm:$0xff]
    %v96 = vld [vmem:[#allocation2 + $0x68] sm:$0xff]
    %v97 = vld [vmem:[#allocation2 + $0x70] sm:$0xff]
    %v98 = vld [vmem:[#allocation2 + $0x78] sm:$0xff]
    %v99 = vld [vmem:[#allocation2 + $0x80] sm:$0xff]
    %v100 = vld [vmem:[#allocation2 + $0x88] sm:$0xff]
    %v101 = vld [vmem:[#allocation2 + $0x90] sm:$0xff]
    %v102 = vld [vmem:[#allocation2 + $0x98] sm:$0xff]
    %v103 = vld [vmem:[#allocation2 + $0xa0] sm:$0xff]
    %v104 = vld [vmem:[#allocation2 + $0xa8] sm:$0xff]
    %v105 = vld [vmem:[#allocation2 + $0xb0] sm:$0xff]
    %v106 = vld [vmem:[#allocation2 + $0xb8] sm:$0xff]
    %v107 = vld [vmem:[#allocation2 + $0xc0] sm:$0xff]
    %v108 = vld [vmem:[#allocation2 + $0xc8] sm:$0xff]
    %v109 = vld [vmem:[#allocation2 + $0xd0] sm:$0xff]
    %v110 = vld [vmem:[#allocation2 + $0xd8] sm:$0xff]
    %v111 = vld [vmem:[#allocation2 + $0xe0] sm:$0xff]
    %v112 = vld [vmem:[#allocation2 + $0xe8] sm:$0xff]
    %v113 = vld [vmem:[#allocation2 + $0xf0] sm:$0xff]
    %v114 = vld [vmem:[#allocation2 + $0xf8] sm:$0xff]
    %v115 = vld [vmem:[#allocation2 + $0x100] sm:$0xff]
    %v116 = vld [vmem:[#allocation2 + $0x108] sm:$0xff]
    %v117 = vld [vmem:[#allocation2 + $0x110] sm:$0xff]
    %v118 = vld [vmem:[#allocation2 + $0x118] sm:$0xff]
    %v119 = vld [vmem:[#allocation2 + $0x120] sm:$0xff]
    %v120 = vld [vmem:[#allocation2 + $0x128] sm:$0xff]
    %v121 = vld [vmem:[#allocation5] sm:$0xf]
    %v122 = vld [vmem:[#allocation5 + $0x4] sm:$0xf]
    %v123 = vld [vmem:[#allocation5 + $0x8] sm:$0xf]
    %v124 = vld [vmem:[#allocation5 + $0xc] sm:$0xf]
    %v125 = vld [vmem:[#allocation5 + $0x10] sm:$0xf]
    %v126 = vld [vmem:[#allocation5 + $0x14] sm:$0xf]
    %v127 = vld [vmem:[#allocation5 + $0x18] sm:$0xf]
    %v128 = vld [vmem:[#allocation5 + $0x1c] sm:$0xf]
    %v129 = vld [vmem:[#allocation5 + $0x20] sm:$0xf]
    %v130 = vld [vmem:[#allocation5 + $0x24] sm:$0xf]
    %v131 = vld [vmem:[#allocation5 + $0x28] sm:$0xf]
    %v132 = vld [vmem:[#allocation5 + $0x2c] sm:$0xf]
    %v133 = vld [vmem:[#allocation5 + $0x30] sm:$0xf]
    %v134 = vld [vmem:[#allocation5 + $0x34] sm:$0xf]
    %v135 = vld [vmem:[#allocation5 + $0x38] sm:$0xf]
    %v136 = vld [vmem:[#allocation5 + $0x3c] sm:$0xf]
    %v137 = vld [vmem:[%s2] sm:$0x1]
    %v138 = vpack.c.bf16 %v84, %v83
    %v139 = vpack.c.bf16 %v86, %v85
    %v140 = vpack.c.bf16 %v88, %v87
    %v141 = vpack.c.bf16 %v90, %v89
    %v142 = vpack.c.bf16 %v92, %v91
    %v143 = vpack.c.bf16 %v94, %v93
    %v144 = vpack.c.bf16 %v96, %v95
    %v145 = vpack.c.bf16 %v98, %v97
    %v146 = vpack.c.bf16 %v100, %v99
    %v147 = vpack.c.bf16 %v102, %v101
    %v148 = vpack.c.bf16 %v104, %v103
    %v149 = vpack.c.bf16 %v106, %v105
    %v150 = vpack.c.bf16 %v108, %v107
    %v151 = vpack.c.bf16 %v110, %v109
    %v152 = vpack.c.bf16 %v112, %v111
    %v153 = vpack.c.bf16 %v114, %v113
    %v154 = vpack.c.bf16 %v116, %v115
    %v155 = vpack.c.bf16 %v118, %v117
    %v156 = vpack.c.bf16 %v120, %v119
    %v158 = vlaneseq
    %v159 = vshrl.u32 %v158, 7
    %v160 = vsub.s32 0, %v159
    %v161 = vrot.slane %v137, %v160
    %v179 = vunpack.c.l.b16 %v121
    %v180 = vunpack.c.l.b16 %v122
    %v181 = vunpack.c.l.b16 %v123
    %v182 = vunpack.c.l.b16 %v124
    %v183 = vunpack.c.l.b16 %v125
    %v184 = vunpack.c.l.b16 %v126
    %v185 = vunpack.c.l.b16 %v127
    %v186 = vunpack.c.l.b16 %v128
    %v187 = vunpack.c.l.b16 %v129
    %v188 = vunpack.c.l.b16 %v130
    %v189 = vunpack.c.l.b16 %v131
    %v190 = vunpack.c.l.b16 %v132
    %v191 = vunpack.c.l.b16 %v133
    %v192 = vunpack.c.l.b16 %v134
    %v193 = vunpack.c.l.b16 %v135
    %v194 = vunpack.c.l.b16 %v136
    %v195 = vpack.c.b16 %v180, %v179
    %v196 = vpack.c.b16 %v182, %v181
    %v197 = vpack.c.b16 %v184, %v183
    %v198 = vpack.c.b16 %v186, %v185
    %v199 = vpack.c.b16 %v188, %v187
    %v200 = vpack.c.b16 %v190, %v189
    %v201 = vpack.c.b16 %v192, %v191
    %v202 = vpack.c.b16 %v194, %v193
    %211 = vmatprep.subr.bf16.mxu0 0
    %212 = vmatpush1.bf16.msra.mxu0 %v195
    %213 = vmatprep.subr.bf16.mxu0 0
    %214 = vmatpush1.bf16.msra.mxu0 %v196
    %215 = vmatprep.subr.bf16.mxu0 0
    %216 = vmatpush1.bf16.msra.mxu0 %v197
    %217 = vmatprep.subr.bf16.mxu0 0
    %218 = vmatpush1.bf16.msra.mxu0 %v198
    %219 = vmatprep.subr.bf16.mxu0 0
    %220 = vmatpush1.bf16.msra.mxu0 %v199
    %221 = vmatprep.subr.bf16.mxu0 0
    %222 = vmatpush1.bf16.msra.mxu0 %v200
    %223 = vmatprep.subr.bf16.mxu0 0
    %224 = vmatpush1.bf16.msra.mxu0 %v201
    %225 = vmatprep.subr.bf16.mxu0 0
    %226 = vmatpush1.bf16.msra.mxu0 %v202
    %227 = vmatprep.subr.bf16.mxu0 0
    %228 = vmatpush1.bf16.msra.mxu0 0
    %229 = vmatprep.subr.bf16.mxu0 0
    %230 = vmatpush1.bf16.msra.mxu0 0
    %231 = vmatprep.subr.bf16.mxu0 0
    %232 = vmatpush1.bf16.msra.mxu0 0
    %233 = vmatprep.subr.bf16.mxu0 0
    %234 = vmatpush1.bf16.msra.mxu0 0
    %235 = vmatprep.subr.bf16.mxu0 0
    %236 = vmatpush1.bf16.msra.mxu0 0
    %237 = vmatprep.subr.bf16.mxu0 0
    %238 = vmatpush1.bf16.msra.mxu0 0
    %239 = vmatprep.subr.bf16.mxu0 0
    %240 = vmatpush1.bf16.msra.mxu0 0
    %241 = vmatprep.subr.bf16.mxu0 0
    %242 = vmatpush1.bf16.msra.mxu0 0
    %243 = vmatprep.mubr.bf16.mxu0 0
    %244 = vmatmul.mubr.bf16.gmra.mrb[0].mxu0 %v138
    %v245 = vpop.f32.mrb[0].mxu0
    %v246 = vadd.f32 %v161, %v245
    %v247 = vpop.f32.mrb[0].mxu0
    %v248 = vpop.f32.mrb[0].mxu0
    %v249 = vadd.f32 %v161, %v248
    %v250 = vpop.f32.mrb[0].mxu0
    %251 = vmatprep.mubr.bf16.mxu0 0
    %252 = vmatmul.mubr.bf16.gmra.mrb[0].mxu0 %v139
    %v253 = vpop.f32.mrb[0].mxu0
    %v254 = vadd.f32 %v161, %v253
    %v255 = vpop.f32.mrb[0].mxu0
    %v256 = vpop.f32.mrb[0].mxu0
    %v257 = vadd.f32 %v161, %v256
    %v258 = vpop.f32.mrb[0].mxu0
    %259 = vmatprep.mubr.bf16.mxu0 0
    %260 = vmatmul.mubr.bf16.gmra.mrb[0].mxu0 %v140
    %v261 = vpop.f32.mrb[0].mxu0
    %v262 = vadd.f32 %v161, %v261
    %v263 = vpop.f32.mrb[0].mxu0
    %v264 = vpop.f32.mrb[0].mxu0
    %v265 = vadd.f32 %v161, %v264
    %v266 = vpop.f32.mrb[0].mxu0
    %267 = vmatprep.mubr.bf16.mxu0 0
    %268 = vmatmul.mubr.bf16.gmra.mrb[0].mxu0 %v141
    %v269 = vpop.f32.mrb[0].mxu0
    %v270 = vadd.f32 %v161, %v269
    %v271 = vpop.f32.mrb[0].mxu0
    %v272 = vpop.f32.mrb[0].mxu0
    %v273 = vadd.f32 %v161, %v272
    %v274 = vpop.f32.mrb[0].mxu0
    %275 = vmatprep.mubr.bf16.mxu0 0
    %276 = vmatmul.mubr.bf16.gmra.mrb[0].mxu0 %v142
    %v277 = vpop.f32.mrb[0].mxu0
    %v278 = vadd.f32 %v161, %v277
    %v279 = vpop.f32.mrb[0].mxu0
    %v280 = vpop.f32.mrb[0].mxu0
    %v281 = vadd.f32 %v161, %v280
    %v282 = vpop.f32.mrb[0].mxu0
    %283 = vmatprep.mubr.bf16.mxu0 0
    %284 = vmatmul.mubr.bf16.gmra.mrb[0].mxu0 %v143
    %v285 = vpop.f32.mrb[0].mxu0
    %v286 = vadd.f32 %v161, %v285
    %v287 = vpop.f32.mrb[0].mxu0
    %v288 = vpop.f32.mrb[0].mxu0
    %v289 = vadd.f32 %v161, %v288
    %v290 = vpop.f32.mrb[0].mxu0
    %291 = vmatprep.mubr.bf16.mxu0 0
    %292 = vmatmul.mubr.bf16.gmra.mrb[0].mxu0 %v144
    %v293 = vpop.f32.mrb[0].mxu0
    %v294 = vadd.f32 %v161, %v293
    %v295 = vpop.f32.mrb[0].mxu0
    %v296 = vpop.f32.mrb[0].mxu0
    %v297 = vadd.f32 %v161, %v296
    %v298 = vpop.f32.mrb[0].mxu0
    %299 = vmatprep.mubr.bf16.mxu0 0
    %300 = vmatmul.mubr.bf16.gmra.mrb[0].mxu0 %v145
    %v301 = vpop.f32.mrb[0].mxu0
    %v302 = vadd.f32 %v161, %v301
    %v303 = vpop.f32.mrb[0].mxu0
    %v304 = vpop.f32.mrb[0].mxu0
    %v305 = vadd.f32 %v161, %v304
    %v306 = vpop.f32.mrb[0].mxu0
    %307 = vmatprep.mubr.bf16.mxu0 0
    %308 = vmatmul.mubr.bf16.gmra.mrb[0].mxu0 %v146
    %v309 = vpop.f32.mrb[0].mxu0
    %v310 = vadd.f32 %v161, %v309
    %v311 = vpop.f32.mrb[0].mxu0
    %v312 = vpop.f32.mrb[0].mxu0
    %v313 = vadd.f32 %v161, %v312
    %v314 = vpop.f32.mrb[0].mxu0
    %315 = vmatprep.mubr.bf16.mxu0 0
    %316 = vmatmul.mubr.bf16.gmra.mrb[0].mxu0 %v147
    %v317 = vpop.f32.mrb[0].mxu0
    %v318 = vadd.f32 %v161, %v317
    %v319 = vpop.f32.mrb[0].mxu0
    %v320 = vpop.f32.mrb[0].mxu0
    %v321 = vadd.f32 %v161, %v320
    %v322 = vpop.f32.mrb[0].mxu0
    %323 = vmatprep.mubr.bf16.mxu0 0
    %324 = vmatmul.mubr.bf16.gmra.mrb[0].mxu0 %v148
    %v325 = vpop.f32.mrb[0].mxu0
    %v326 = vadd.f32 %v161, %v325
    %v327 = vpop.f32.mrb[0].mxu0
    %v328 = vpop.f32.mrb[0].mxu0
    %v329 = vadd.f32 %v161, %v328
    %v330 = vpop.f32.mrb[0].mxu0
    %331 = vmatprep.mubr.bf16.mxu0 0
    %332 = vmatmul.mubr.bf16.gmra.mrb[0].mxu0 %v149
    %v333 = vpop.f32.mrb[0].mxu0
    %v334 = vadd.f32 %v161, %v333
    %v335 = vpop.f32.mrb[0].mxu0
    %v336 = vpop.f32.mrb[0].mxu0
    %v337 = vadd.f32 %v161, %v336
    %v338 = vpop.f32.mrb[0].mxu0
    %339 = vmatprep.mubr.bf16.mxu0 0
    %340 = vmatmul.mubr.bf16.gmra.mrb[0].mxu0 %v150
    %v341 = vpop.f32.mrb[0].mxu0
    %v342 = vadd.f32 %v161, %v341
    %v343 = vpop.f32.mrb[0].mxu0
    %v344 = vpop.f32.mrb[0].mxu0
    %v345 = vadd.f32 %v161, %v344
    %v346 = vpop.f32.mrb[0].mxu0
    %347 = vmatprep.mubr.bf16.mxu0 0
    %348 = vmatmul.mubr.bf16.gmra.mrb[0].mxu0 %v151
    %v349 = vpop.f32.mrb[0].mxu0
    %v350 = vadd.f32 %v161, %v349
    %v351 = vpop.f32.mrb[0].mxu0
    %v352 = vpop.f32.mrb[0].mxu0
    %v353 = vadd.f32 %v161, %v352
    %v354 = vpop.f32.mrb[0].mxu0
    %355 = vmatprep.mubr.bf16.mxu0 0
    %356 = vmatmul.mubr.bf16.gmra.mrb[0].mxu0 %v152
    %v357 = vpop.f32.mrb[0].mxu0
    %v358 = vadd.f32 %v161, %v357
    %v359 = vpop.f32.mrb[0].mxu0
    %v360 = vpop.f32.mrb[0].mxu0
    %v361 = vadd.f32 %v161, %v360
    %v362 = vpop.f32.mrb[0].mxu0
    %363 = vmatprep.mubr.bf16.mxu0 0
    %364 = vmatmul.mubr.bf16.gmra.mrb[0].mxu0 %v153
    %v365 = vpop.f32.mrb[0].mxu0
    %v366 = vadd.f32 %v161, %v365
    %v367 = vpop.f32.mrb[0].mxu0
    %v368 = vpop.f32.mrb[0].mxu0
    %v369 = vadd.f32 %v161, %v368
    %v370 = vpop.f32.mrb[0].mxu0
    %371 = vmatprep.mubr.bf16.mxu0 0
    %372 = vmatmul.mubr.bf16.gmra.mrb[0].mxu0 %v154
    %v373 = vpop.f32.mrb[0].mxu0
    %v374 = vadd.f32 %v161, %v373
    %v375 = vpop.f32.mrb[0].mxu0
    %v376 = vpop.f32.mrb[0].mxu0
    %v377 = vadd.f32 %v161, %v376
    %v378 = vpop.f32.mrb[0].mxu0
    %379 = vmatprep.mubr.bf16.mxu0 0
    %380 = vmatmul.mubr.bf16.gmra.mrb[0].mxu0 %v155
    %v381 = vpop.f32.mrb[0].mxu0
    %v382 = vadd.f32 %v161, %v381
    %v383 = vpop.f32.mrb[0].mxu0
    %v384 = vpop.f32.mrb[0].mxu0
    %v385 = vadd.f32 %v161, %v384
    %v386 = vpop.f32.mrb[0].mxu0
    %387 = vmatprep.mubr.bf16.mxu0 0
    %388 = vmatmul.mubr.bf16.gmra.mrb[0].mxu0 %v156
    %v389 = vpop.f32.mrb[0].mxu0
    %v390 = vadd.f32 %v161, %v389
    %v391 = vpop.f32.mrb[0].mxu0
    %v392 = vpop.f32.mrb[0].mxu0
    %v393 = vadd.f32 %v161, %v392
    %v394 = vpop.f32.mrb[0].mxu0
    %395 = vdwg.mxu0
    %v396 = vmax.f32 %v246, 0.0
    %v397 = vmax.f32 %v249, 0.0
    %v398 = vmax.f32 %v254, 0.0
    %v399 = vmax.f32 %v257, 0.0
    %v400 = vmax.f32 %v262, 0.0
    %v401 = vmax.f32 %v265, 0.0
    %v402 = vmax.f32 %v270, 0.0
    %v403 = vmax.f32 %v273, 0.0
    %v404 = vmax.f32 %v278, 0.0
    %v405 = vmax.f32 %v281, 0.0
    %v406 = vmax.f32 %v286, 0.0
    %v407 = vmax.f32 %v289, 0.0
    %v408 = vmax.f32 %v294, 0.0
    %v409 = vmax.f32 %v297, 0.0
    %v410 = vmax.f32 %v302, 0.0
    %v411 = vmax.f32 %v305, 0.0
    %v412 = vmax.f32 %v310, 0.0
    %v413 = vmax.f32 %v313, 0.0
    %v414 = vmax.f32 %v318, 0.0
    %v415 = vmax.f32 %v321, 0.0
    %v416 = vmax.f32 %v326, 0.0
    %v417 = vmax.f32 %v329, 0.0
    %v418 = vmax.f32 %v334, 0.0
    %v419 = vmax.f32 %v337, 0.0
    %v420 = vmax.f32 %v342, 0.0
    %v421 = vmax.f32 %v345, 0.0
    %v422 = vmax.f32 %v350, 0.0
    %v423 = vmax.f32 %v353, 0.0
    %v424 = vmax.f32 %v358, 0.0
    %v425 = vmax.f32 %v361, 0.0
    %v426 = vmax.f32 %v366, 0.0
    %v427 = vmax.f32 %v369, 0.0
    %v428 = vmax.f32 %v374, 0.0
    %v429 = vmax.f32 %v377, 0.0
    %v430 = vmax.f32 %v382, 0.0
    %v431 = vmax.f32 %v385, 0.0
    %v432 = vmax.f32 %v390, 0.0
    %v433 = vmax.f32 %v393, 0.0
    %v434 = vld [vmem:[#allocation7] sm:$0xf]
    %v435 = vld [vmem:[#allocation7 + $0x4] sm:$0xf]
    %v436 = vld [vmem:[#allocation7 + $0x8] sm:$0xf]
    %v437 = vld [vmem:[#allocation7 + $0xc] sm:$0xf]
    %v438 = vld [vmem:[#allocation7 + $0x10] sm:$0xf]
    %v439 = vld [vmem:[#allocation7 + $0x14] sm:$0xf]
    %v440 = vld [vmem:[#allocation7 + $0x18] sm:$0xf]
    %v441 = vld [vmem:[#allocation7 + $0x1c] sm:$0xf]
    %v442 = vld [vmem:[#allocation7 + $0x20] sm:$0xf]
    %v443 = vld [vmem:[#allocation7 + $0x24] sm:$0xf]
    %v444 = vld [vmem:[#allocation7 + $0x28] sm:$0xf]
    %v445 = vld [vmem:[#allocation7 + $0x2c] sm:$0xf]
    %v446 = vld [vmem:[#allocation7 + $0x30] sm:$0xf]
    %v447 = vld [vmem:[#allocation7 + $0x34] sm:$0xf]
    %v448 = vld [vmem:[#allocation7 + $0x38] sm:$0xf]
    %v449 = vld [vmem:[#allocation7 + $0x3c] sm:$0xf]
    %v450 = vld [vmem:[%s4] sm:$0x1]
    %v451 = vpack.c.bf16 %v397, %v396
    %v452 = vpack.c.bf16 %v399, %v398
    %v453 = vpack.c.bf16 %v401, %v400
    %v454 = vpack.c.bf16 %v403, %v402
    %v455 = vpack.c.bf16 %v405, %v404
    %v456 = vpack.c.bf16 %v407, %v406
    %v457 = vpack.c.bf16 %v409, %v408
    %v458 = vpack.c.bf16 %v411, %v410
    %v459 = vpack.c.bf16 %v413, %v412
    %v460 = vpack.c.bf16 %v415, %v414
    %v461 = vpack.c.bf16 %v417, %v416
    %v462 = vpack.c.bf16 %v419, %v418
    %v463 = vpack.c.bf16 %v421, %v420
    %v464 = vpack.c.bf16 %v423, %v422
    %v465 = vpack.c.bf16 %v425, %v424
    %v466 = vpack.c.bf16 %v427, %v426
    %v467 = vpack.c.bf16 %v429, %v428
    %v468 = vpack.c.bf16 %v431, %v430
    %v469 = vpack.c.bf16 %v433, %v432
    %v471 = vlaneseq
    %v472 = vshrl.u32 %v471, 7
    %v473 = vsub.s32 0, %v472
    %v474 = vrot.slane %v450, %v473
    %v492 = vunpack.c.l.b16 %v434
    %v493 = vunpack.c.l.b16 %v435
    %v494 = vunpack.c.l.b16 %v436
    %v495 = vunpack.c.l.b16 %v437
    %v496 = vunpack.c.l.b16 %v438
    %v497 = vunpack.c.l.b16 %v439
    %v498 = vunpack.c.l.b16 %v440
    %v499 = vunpack.c.l.b16 %v441
    %v500 = vunpack.c.l.b16 %v442
    %v501 = vunpack.c.l.b16 %v443
    %v502 = vunpack.c.l.b16 %v444
    %v503 = vunpack.c.l.b16 %v445
    %v504 = vunpack.c.l.b16 %v446
    %v505 = vunpack.c.l.b16 %v447
    %v506 = vunpack.c.l.b16 %v448
    %v507 = vunpack.c.l.b16 %v449
    %v508 = vpack.c.b16 %v493, %v492
    %v509 = vpack.c.b16 %v495, %v494
    %v510 = vpack.c.b16 %v497, %v496
    %v511 = vpack.c.b16 %v499, %v498
    %v512 = vpack.c.b16 %v501, %v500
    %v513 = vpack.c.b16 %v503, %v502
    %v514 = vpack.c.b16 %v505, %v504
    %v515 = vpack.c.b16 %v507, %v506
    %524 = vmatprep.subr.bf16.mxu0 0
    %525 = vmatpush1.bf16.msra.mxu0 %v508
    %526 = vmatprep.subr.bf16.mxu0 0
    %527 = vmatpush1.bf16.msra.mxu0 %v509
    %528 = vmatprep.subr.bf16.mxu0 0
    %529 = vmatpush1.bf16.msra.mxu0 %v510
    %530 = vmatprep.subr.bf16.mxu0 0
    %531 = vmatpush1.bf16.msra.mxu0 %v511
    %532 = vmatprep.subr.bf16.mxu0 0
    %533 = vmatpush1.bf16.msra.mxu0 %v512
    %534 = vmatprep.subr.bf16.mxu0 0
    %535 = vmatpush1.bf16.msra.mxu0 %v513
    %536 = vmatprep.subr.bf16.mxu0 0
    %537 = vmatpush1.bf16.msra.mxu0 %v514
    %538 = vmatprep.subr.bf16.mxu0 0
    %539 = vmatpush1.bf16.msra.mxu0 %v515
    %540 = vmatprep.subr.bf16.mxu0 0
    %541 = vmatpush1.bf16.msra.mxu0 0
    %542 = vmatprep.subr.bf16.mxu0 0
    %543 = vmatpush1.bf16.msra.mxu0 0
    %544 = vmatprep.subr.bf16.mxu0 0
    %545 = vmatpush1.bf16.msra.mxu0 0
    %546 = vmatprep.subr.bf16.mxu0 0
    %547 = vmatpush1.bf16.msra.mxu0 0
    %548 = vmatprep.subr.bf16.mxu0 0
    %549 = vmatpush1.bf16.msra.mxu0 0
    %550 = vmatprep.subr.bf16.mxu0 0
    %551 = vmatpush1.bf16.msra.mxu0 0
    %552 = vmatprep.subr.bf16.mxu0 0
    %553 = vmatpush1.bf16.msra.mxu0 0
    %554 = vmatprep.subr.bf16.mxu0 0
    %555 = vmatpush1.bf16.msra.mxu0 0
    %556 = vmatprep.mubr.bf16.mxu0 0
    %557 = vmatmul.mubr.bf16.gmra.mrb[0].mxu0 %v451
    %v558 = vpop.f32.mrb[0].mxu0
    %v559 = vadd.f32 %v474, %v558
    %v560 = vpop.f32.mrb[0].mxu0
    %v561 = vpop.f32.mrb[0].mxu0
    %v562 = vadd.f32 %v474, %v561
    %v563 = vpop.f32.mrb[0].mxu0
    %564 = vmatprep.mubr.bf16.mxu0 0
    %565 = vmatmul.mubr.bf16.gmra.mrb[0].mxu0 %v452
    %v566 = vpop.f32.mrb[0].mxu0
    %v567 = vadd.f32 %v474, %v566
    %v568 = vpop.f32.mrb[0].mxu0
    %v569 = vpop.f32.mrb[0].mxu0
    %v570 = vadd.f32 %v474, %v569
    %v571 = vpop.f32.mrb[0].mxu0
    %572 = vmatprep.mubr.bf16.mxu0 0
    %573 = vmatmul.mubr.bf16.gmra.mrb[0].mxu0 %v453
    %v574 = vpop.f32.mrb[0].mxu0
    %v575 = vadd.f32 %v474, %v574
    %v576 = vpop.f32.mrb[0].mxu0
    %v577 = vpop.f32.mrb[0].mxu0
    %v578 = vadd.f32 %v474, %v577
    %v579 = vpop.f32.mrb[0].mxu0
    %580 = vmatprep.mubr.bf16.mxu0 0
    %581 = vmatmul.mubr.bf16.gmra.mrb[0].mxu0 %v454
    %v582 = vpop.f32.mrb[0].mxu0
    %v583 = vadd.f32 %v474, %v582
    %v584 = vpop.f32.mrb[0].mxu0
    %v585 = vpop.f32.mrb[0].mxu0
    %v586 = vadd.f32 %v474, %v585
    %v587 = vpop.f32.mrb[0].mxu0
    %588 = vmatprep.mubr.bf16.mxu0 0
    %589 = vmatmul.mubr.bf16.gmra.mrb[0].mxu0 %v455
    %v590 = vpop.f32.mrb[0].mxu0
    %v591 = vadd.f32 %v474, %v590
    %v592 = vpop.f32.mrb[0].mxu0
    %v593 = vpop.f32.mrb[0].mxu0
    %v594 = vadd.f32 %v474, %v593
    %v595 = vpop.f32.mrb[0].mxu0
    %596 = vmatprep.mubr.bf16.mxu0 0
    %597 = vmatmul.mubr.bf16.gmra.mrb[0].mxu0 %v456
    %v598 = vpop.f32.mrb[0].mxu0
    %v599 = vadd.f32 %v474, %v598
    %v600 = vpop.f32.mrb[0].mxu0
    %v601 = vpop.f32.mrb[0].mxu0
    %v602 = vadd.f32 %v474, %v601
    %v603 = vpop.f32.mrb[0].mxu0
    %604 = vmatprep.mubr.bf16.mxu0 0
    %605 = vmatmul.mubr.bf16.gmra.mrb[0].mxu0 %v457
    %v606 = vpop.f32.mrb[0].mxu0
    %v607 = vadd.f32 %v474, %v606
    %v608 = vpop.f32.mrb[0].mxu0
    %v609 = vpop.f32.mrb[0].mxu0
    %v610 = vadd.f32 %v474, %v609
    %v611 = vpop.f32.mrb[0].mxu0
    %612 = vmatprep.mubr.bf16.mxu0 0
    %613 = vmatmul.mubr.bf16.gmra.mrb[0].mxu0 %v458
    %v614 = vpop.f32.mrb[0].mxu0
    %v615 = vadd.f32 %v474, %v614
    %v616 = vpop.f32.mrb[0].mxu0
    %v617 = vpop.f32.mrb[0].mxu0
    %v618 = vadd.f32 %v474, %v617
    %v619 = vpop.f32.mrb[0].mxu0
    %620 = vmatprep.mubr.bf16.mxu0 0
    %621 = vmatmul.mubr.bf16.gmra.mrb[0].mxu0 %v459
    %v622 = vpop.f32.mrb[0].mxu0
    %v623 = vadd.f32 %v474, %v622
    %v624 = vpop.f32.mrb[0].mxu0
    %v625 = vpop.f32.mrb[0].mxu0
    %v626 = vadd.f32 %v474, %v625
    %v627 = vpop.f32.mrb[0].mxu0
    %628 = vmatprep.mubr.bf16.mxu0 0
    %629 = vmatmul.mubr.bf16.gmra.mrb[0].mxu0 %v460
    %v630 = vpop.f32.mrb[0].mxu0
    %v631 = vadd.f32 %v474, %v630
    %v632 = vpop.f32.mrb[0].mxu0
    %v633 = vpop.f32.mrb[0].mxu0
    %v634 = vadd.f32 %v474, %v633
    %v635 = vpop.f32.mrb[0].mxu0
    %636 = vmatprep.mubr.bf16.mxu0 0
    %637 = vmatmul.mubr.bf16.gmra.mrb[0].mxu0 %v461
    %v638 = vpop.f32.mrb[0].mxu0
    %v639 = vadd.f32 %v474, %v638
    %v640 = vpop.f32.mrb[0].mxu0
    %v641 = vpop.f32.mrb[0].mxu0
    %v642 = vadd.f32 %v474, %v641
    %v643 = vpop.f32.mrb[0].mxu0
    %644 = vmatprep.mubr.bf16.mxu0 0
    %645 = vmatmul.mubr.bf16.gmra.mrb[0].mxu0 %v462
    %v646 = vpop.f32.mrb[0].mxu0
    %v647 = vadd.f32 %v474, %v646
    %v648 = vpop.f32.mrb[0].mxu0
    %v649 = vpop.f32.mrb[0].mxu0
    %v650 = vadd.f32 %v474, %v649
    %v651 = vpop.f32.mrb[0].mxu0
    %652 = vmatprep.mubr.bf16.mxu0 0
    %653 = vmatmul.mubr.bf16.gmra.mrb[0].mxu0 %v463
    %v654 = vpop.f32.mrb[0].mxu0
    %v655 = vadd.f32 %v474, %v654
    %v656 = vpop.f32.mrb[0].mxu0
    %v657 = vpop.f32.mrb[0].mxu0
    %v658 = vadd.f32 %v474, %v657
    %v659 = vpop.f32.mrb[0].mxu0
    %660 = vmatprep.mubr.bf16.mxu0 0
    %661 = vmatmul.mubr.bf16.gmra.mrb[0].mxu0 %v464
    %v662 = vpop.f32.mrb[0].mxu0
    %v663 = vadd.f32 %v474, %v662
    %v664 = vpop.f32.mrb[0].mxu0
    %v665 = vpop.f32.mrb[0].mxu0
    %v666 = vadd.f32 %v474, %v665
    %v667 = vpop.f32.mrb[0].mxu0
    %668 = vmatprep.mubr.bf16.mxu0 0
    %669 = vmatmul.mubr.bf16.gmra.mrb[0].mxu0 %v465
    %v670 = vpop.f32.mrb[0].mxu0
    %v671 = vadd.f32 %v474, %v670
    %v672 = vpop.f32.mrb[0].mxu0
    %v673 = vpop.f32.mrb[0].mxu0
    %v674 = vadd.f32 %v474, %v673
    %v675 = vpop.f32.mrb[0].mxu0
    %676 = vmatprep.mubr.bf16.mxu0 0
    %677 = vmatmul.mubr.bf16.gmra.mrb[0].mxu0 %v466
    %v678 = vpop.f32.mrb[0].mxu0
    %v679 = vadd.f32 %v474, %v678
    %v680 = vpop.f32.mrb[0].mxu0
    %v681 = vpop.f32.mrb[0].mxu0
    %v682 = vadd.f32 %v474, %v681
    %v683 = vpop.f32.mrb[0].mxu0
    %684 = vmatprep.mubr.bf16.mxu0 0
    %685 = vmatmul.mubr.bf16.gmra.mrb[0].mxu0 %v467
    %v686 = vpop.f32.mrb[0].mxu0
    %v687 = vadd.f32 %v474, %v686
    %v688 = vpop.f32.mrb[0].mxu0
    %v689 = vpop.f32.mrb[0].mxu0
    %v690 = vadd.f32 %v474, %v689
    %v691 = vpop.f32.mrb[0].mxu0
    %692 = vmatprep.mubr.bf16.mxu0 0
    %693 = vmatmul.mubr.bf16.gmra.mrb[0].mxu0 %v468
    %v694 = vpop.f32.mrb[0].mxu0
    %v695 = vadd.f32 %v474, %v694
    %v696 = vpop.f32.mrb[0].mxu0
    %v697 = vpop.f32.mrb[0].mxu0
    %v698 = vadd.f32 %v474, %v697
    %v699 = vpop.f32.mrb[0].mxu0
    %700 = vmatprep.mubr.bf16.mxu0 0
    %701 = vmatmul.mubr.bf16.gmra.mrb[0].mxu0 %v469
    %v702 = vpop.f32.mrb[0].mxu0
    %v703 = vadd.f32 %v474, %v702
    %v704 = vpop.f32.mrb[0].mxu0
    %v705 = vpop.f32.mrb[0].mxu0
    %v706 = vadd.f32 %v474, %v705
    %v707 = vpop.f32.mrb[0].mxu0
    %708 = vdwg.mxu0
    %v709 = vmax.f32 %v559, 0.0
    %v710 = vmax.f32 %v562, 0.0
    %v711 = vmax.f32 %v567, 0.0
    %v712 = vmax.f32 %v570, 0.0
    %v713 = vmax.f32 %v575, 0.0
    %v714 = vmax.f32 %v578, 0.0
    %v715 = vmax.f32 %v583, 0.0
    %v716 = vmax.f32 %v586, 0.0
    %v717 = vmax.f32 %v591, 0.0
    %v718 = vmax.f32 %v594, 0.0
    %v719 = vmax.f32 %v599, 0.0
    %v720 = vmax.f32 %v602, 0.0
    %v721 = vmax.f32 %v607, 0.0
    %v722 = vmax.f32 %v610, 0.0
    %v723 = vmax.f32 %v615, 0.0
    %v724 = vmax.f32 %v618, 0.0
    %v725 = vmax.f32 %v623, 0.0
    %v726 = vmax.f32 %v626, 0.0
    %v727 = vmax.f32 %v631, 0.0
    %v728 = vmax.f32 %v634, 0.0
    %v729 = vmax.f32 %v639, 0.0
    %v730 = vmax.f32 %v642, 0.0
    %v731 = vmax.f32 %v647, 0.0
    %v732 = vmax.f32 %v650, 0.0
    %v733 = vmax.f32 %v655, 0.0
    %v734 = vmax.f32 %v658, 0.0
    %v735 = vmax.f32 %v663, 0.0
    %v736 = vmax.f32 %v666, 0.0
    %v737 = vmax.f32 %v671, 0.0
    %v738 = vmax.f32 %v674, 0.0
    %v739 = vmax.f32 %v679, 0.0
    %v740 = vmax.f32 %v682, 0.0
    %v741 = vmax.f32 %v687, 0.0
    %v742 = vmax.f32 %v690, 0.0
    %v743 = vmax.f32 %v695, 0.0
    %v744 = vmax.f32 %v698, 0.0
    %v745 = vmax.f32 %v703, 0.0
    %v746 = vmax.f32 %v706, 0.0
    %v747 = vld [vmem:[#allocation8] sm:$0xf]
    %v748 = vld [vmem:[#allocation8 + $0x4] sm:$0xf]
    %v749 = vld [vmem:[#allocation8 + $0x8] sm:$0xf]
    %v750 = vld [vmem:[#allocation8 + $0xc] sm:$0xf]
    %v751 = vld [vmem:[#allocation8 + $0x10] sm:$0xf]
    %v752 = vld [vmem:[#allocation8 + $0x14] sm:$0xf]
    %v753 = vld [vmem:[#allocation8 + $0x18] sm:$0xf]
    %v754 = vld [vmem:[#allocation8 + $0x1c] sm:$0xf]
    %v755 = vld [vmem:[#allocation8 + $0x20] sm:$0xf]
    %v756 = vld [vmem:[#allocation8 + $0x24] sm:$0xf]
    %v757 = vld [vmem:[#allocation8 + $0x28] sm:$0xf]
    %v758 = vld [vmem:[#allocation8 + $0x2c] sm:$0xf]
    %v759 = vld [vmem:[#allocation8 + $0x30] sm:$0xf]
    %v760 = vld [vmem:[#allocation8 + $0x34] sm:$0xf]
    %v761 = vld [vmem:[#allocation8 + $0x38] sm:$0xf]
    %v762 = vld [vmem:[#allocation8 + $0x3c] sm:$0xf]
    %v763 = vld [vmem:[%s6] sm:$0x1]
    %v764 = vpack.c.bf16 %v710, %v709
    %v765 = vpack.c.bf16 %v712, %v711
    %v766 = vpack.c.bf16 %v714, %v713
    %v767 = vpack.c.bf16 %v716, %v715
    %v768 = vpack.c.bf16 %v718, %v717
    %v769 = vpack.c.bf16 %v720, %v719
    %v770 = vpack.c.bf16 %v722, %v721
    %v771 = vpack.c.bf16 %v724, %v723
    %v772 = vpack.c.bf16 %v726, %v725
    %v773 = vpack.c.bf16 %v728, %v727
    %v774 = vpack.c.bf16 %v730, %v729
    %v775 = vpack.c.bf16 %v732, %v731
    %v776 = vpack.c.bf16 %v734, %v733
    %v777 = vpack.c.bf16 %v736, %v735
    %v778 = vpack.c.bf16 %v738, %v737
    %v779 = vpack.c.bf16 %v740, %v739
    %v780 = vpack.c.bf16 %v742, %v741
    %v781 = vpack.c.bf16 %v744, %v743
    %v782 = vpack.c.bf16 %v746, %v745
    %v784 = vlaneseq
    %v785 = vshrl.u32 %v784, 7
    %v786 = vsub.s32 0, %v785
    %v787 = vrot.slane %v763, %v786
    %v805 = vunpack.c.l.b16 %v747
    %v806 = vunpack.c.l.b16 %v748
    %v807 = vunpack.c.l.b16 %v749
    %v808 = vunpack.c.l.b16 %v750
    %v809 = vunpack.c.l.b16 %v751
    %v810 = vunpack.c.l.b16 %v752
    %v811 = vunpack.c.l.b16 %v753
    %v812 = vunpack.c.l.b16 %v754
    %v813 = vunpack.c.l.b16 %v755
    %v814 = vunpack.c.l.b16 %v756
    %v815 = vunpack.c.l.b16 %v757
    %v816 = vunpack.c.l.b16 %v758
    %v817 = vunpack.c.l.b16 %v759
    %v818 = vunpack.c.l.b16 %v760
    %v819 = vunpack.c.l.b16 %v761
    %v820 = vunpack.c.l.b16 %v762
    %v821 = vpack.c.b16 %v806, %v805
    %v822 = vpack.c.b16 %v808, %v807
    %v823 = vpack.c.b16 %v810, %v809
    %v824 = vpack.c.b16 %v812, %v811
    %v825 = vpack.c.b16 %v814, %v813
    %v826 = vpack.c.b16 %v816, %v815
    %v827 = vpack.c.b16 %v818, %v817
    %v828 = vpack.c.b16 %v820, %v819
    %837 = vmatprep.subr.bf16.mxu0 0
    %838 = vmatpush1.bf16.msra.mxu0 %v821
    %839 = vmatprep.subr.bf16.mxu0 0
    %840 = vmatpush1.bf16.msra.mxu0 %v822
    %841 = vmatprep.subr.bf16.mxu0 0
    %842 = vmatpush1.bf16.msra.mxu0 %v823
    %843 = vmatprep.subr.bf16.mxu0 0
    %844 = vmatpush1.bf16.msra.mxu0 %v824
    %845 = vmatprep.subr.bf16.mxu0 0
    %846 = vmatpush1.bf16.msra.mxu0 %v825
    %847 = vmatprep.subr.bf16.mxu0 0
    %848 = vmatpush1.bf16.msra.mxu0 %v826
    %849 = vmatprep.subr.bf16.mxu0 0
    %850 = vmatpush1.bf16.msra.mxu0 %v827
    %851 = vmatprep.subr.bf16.mxu0 0
    %852 = vmatpush1.bf16.msra.mxu0 %v828
    %853 = vmatprep.subr.bf16.mxu0 0
    %854 = vmatpush1.bf16.msra.mxu0 0
    %855 = vmatprep.subr.bf16.mxu0 0
    %856 = vmatpush1.bf16.msra.mxu0 0
    %857 = vmatprep.subr.bf16.mxu0 0
    %858 = vmatpush1.bf16.msra.mxu0 0
    %859 = vmatprep.subr.bf16.mxu0 0
    %860 = vmatpush1.bf16.msra.mxu0 0
    %861 = vmatprep.subr.bf16.mxu0 0
    %862 = vmatpush1.bf16.msra.mxu0 0
    %863 = vmatprep.subr.bf16.mxu0 0
    %864 = vmatpush1.bf16.msra.mxu0 0
    %865 = vmatprep.subr.bf16.mxu0 0
    %866 = vmatpush1.bf16.msra.mxu0 0
    %867 = vmatprep.subr.bf16.mxu0 0
    %868 = vmatpush1.bf16.msra.mxu0 0
    %869 = vmatprep.mubr.bf16.mxu0 0
    %870 = vmatmul.mubr.bf16.gmra.mrb[0].mxu0 %v764
    %v871 = vpop.f32.mrb[0].mxu0
    %v872 = vadd.f32 %v787, %v871
    %v873 = vpop.f32.mrb[0].mxu0
    %v874 = vpop.f32.mrb[0].mxu0
    %v875 = vadd.f32 %v787, %v874
    %v876 = vpop.f32.mrb[0].mxu0
    %877 = vmatprep.mubr.bf16.mxu0 0
    %878 = vmatmul.mubr.bf16.gmra.mrb[0].mxu0 %v765
    %v879 = vpop.f32.mrb[0].mxu0
    %v880 = vadd.f32 %v787, %v879
    %v881 = vpop.f32.mrb[0].mxu0
    %v882 = vpop.f32.mrb[0].mxu0
    %v883 = vadd.f32 %v787, %v882
    %v884 = vpop.f32.mrb[0].mxu0
    %885 = vmatprep.mubr.bf16.mxu0 0
    %886 = vmatmul.mubr.bf16.gmra.mrb[0].mxu0 %v766
    %v887 = vpop.f32.mrb[0].mxu0
    %v888 = vadd.f32 %v787, %v887
    %v889 = vpop.f32.mrb[0].mxu0
    %v890 = vpop.f32.mrb[0].mxu0
    %v891 = vadd.f32 %v787, %v890
    %v892 = vpop.f32.mrb[0].mxu0
    %893 = vmatprep.mubr.bf16.mxu0 0
    %894 = vmatmul.mubr.bf16.gmra.mrb[0].mxu0 %v767
    %v895 = vpop.f32.mrb[0].mxu0
    %v896 = vadd.f32 %v787, %v895
    %v897 = vpop.f32.mrb[0].mxu0
    %v898 = vpop.f32.mrb[0].mxu0
    %v899 = vadd.f32 %v787, %v898
    %v900 = vpop.f32.mrb[0].mxu0
    %901 = vmatprep.mubr.bf16.mxu0 0
    %902 = vmatmul.mubr.bf16.gmra.mrb[0].mxu0 %v768
    %v903 = vpop.f32.mrb[0].mxu0
    %v904 = vadd.f32 %v787, %v903
    %v905 = vpop.f32.mrb[0].mxu0
    %v906 = vpop.f32.mrb[0].mxu0
    %v907 = vadd.f32 %v787, %v906
    %v908 = vpop.f32.mrb[0].mxu0
    %909 = vmatprep.mubr.bf16.mxu0 0
    %910 = vmatmul.mubr.bf16.gmra.mrb[0].mxu0 %v769
    %v911 = vpop.f32.mrb[0].mxu0
    %v912 = vadd.f32 %v787, %v911
    %v913 = vpop.f32.mrb[0].mxu0
    %v914 = vpop.f32.mrb[0].mxu0
    %v915 = vadd.f32 %v787, %v914
    %v916 = vpop.f32.mrb[0].mxu0
    %917 = vmatprep.mubr.bf16.mxu0 0
    %918 = vmatmul.mubr.bf16.gmra.mrb[0].mxu0 %v770
    %v919 = vpop.f32.mrb[0].mxu0
    %v920 = vadd.f32 %v787, %v919
    %v921 = vpop.f32.mrb[0].mxu0
    %v922 = vpop.f32.mrb[0].mxu0
    %v923 = vadd.f32 %v787, %v922
    %v924 = vpop.f32.mrb[0].mxu0
    %925 = vmatprep.mubr.bf16.mxu0 0
    %926 = vmatmul.mubr.bf16.gmra.mrb[0].mxu0 %v771
    %v927 = vpop.f32.mrb[0].mxu0
    %v928 = vadd.f32 %v787, %v927
    %v929 = vpop.f32.mrb[0].mxu0
    %v930 = vpop.f32.mrb[0].mxu0
    %v931 = vadd.f32 %v787, %v930
    %v932 = vpop.f32.mrb[0].mxu0
    %933 = vmatprep.mubr.bf16.mxu0 0
    %934 = vmatmul.mubr.bf16.gmra.mrb[0].mxu0 %v772
    %v935 = vpop.f32.mrb[0].mxu0
    %v936 = vadd.f32 %v787, %v935
    %v937 = vpop.f32.mrb[0].mxu0
    %v938 = vpop.f32.mrb[0].mxu0
    %v939 = vadd.f32 %v787, %v938
    %v940 = vpop.f32.mrb[0].mxu0
    %941 = vmatprep.mubr.bf16.mxu0 0
    %942 = vmatmul.mubr.bf16.gmra.mrb[0].mxu0 %v773
    %v943 = vpop.f32.mrb[0].mxu0
    %v944 = vadd.f32 %v787, %v943
    %v945 = vpop.f32.mrb[0].mxu0
    %v946 = vpop.f32.mrb[0].mxu0
    %v947 = vadd.f32 %v787, %v946
    %v948 = vpop.f32.mrb[0].mxu0
    %949 = vmatprep.mubr.bf16.mxu0 0
    %950 = vmatmul.mubr.bf16.gmra.mrb[0].mxu0 %v774
    %v951 = vpop.f32.mrb[0].mxu0
    %v952 = vadd.f32 %v787, %v951
    %v953 = vpop.f32.mrb[0].mxu0
    %v954 = vpop.f32.mrb[0].mxu0
    %v955 = vadd.f32 %v787, %v954
    %v956 = vpop.f32.mrb[0].mxu0
    %957 = vmatprep.mubr.bf16.mxu0 0
    %958 = vmatmul.mubr.bf16.gmra.mrb[0].mxu0 %v775
    %v959 = vpop.f32.mrb[0].mxu0
    %v960 = vadd.f32 %v787, %v959
    %v961 = vpop.f32.mrb[0].mxu0
    %v962 = vpop.f32.mrb[0].mxu0
    %v963 = vadd.f32 %v787, %v962
    %v964 = vpop.f32.mrb[0].mxu0
    %965 = vmatprep.mubr.bf16.mxu0 0
    %966 = vmatmul.mubr.bf16.gmra.mrb[0].mxu0 %v776
    %v967 = vpop.f32.mrb[0].mxu0
    %v968 = vadd.f32 %v787, %v967
    %v969 = vpop.f32.mrb[0].mxu0
    %v970 = vpop.f32.mrb[0].mxu0
    %v971 = vadd.f32 %v787, %v970
    %v972 = vpop.f32.mrb[0].mxu0
    %973 = vmatprep.mubr.bf16.mxu0 0
    %974 = vmatmul.mubr.bf16.gmra.mrb[0].mxu0 %v777
    %v975 = vpop.f32.mrb[0].mxu0
    %v976 = vadd.f32 %v787, %v975
    %v977 = vpop.f32.mrb[0].mxu0
    %v978 = vpop.f32.mrb[0].mxu0
    %v979 = vadd.f32 %v787, %v978
    %v980 = vpop.f32.mrb[0].mxu0
    %981 = vmatprep.mubr.bf16.mxu0 0
    %982 = vmatmul.mubr.bf16.gmra.mrb[0].mxu0 %v778
    %v983 = vpop.f32.mrb[0].mxu0
    %v984 = vadd.f32 %v787, %v983
    %v985 = vpop.f32.mrb[0].mxu0
    %v986 = vpop.f32.mrb[0].mxu0
    %v987 = vadd.f32 %v787, %v986
    %v988 = vpop.f32.mrb[0].mxu0
    %989 = vmatprep.mubr.bf16.mxu0 0
    %990 = vmatmul.mubr.bf16.gmra.mrb[0].mxu0 %v779
    %v991 = vpop.f32.mrb[0].mxu0
    %v992 = vadd.f32 %v787, %v991
    %v993 = vpop.f32.mrb[0].mxu0
    %v994 = vpop.f32.mrb[0].mxu0
    %v995 = vadd.f32 %v787, %v994
    %v996 = vpop.f32.mrb[0].mxu0
    %997 = vmatprep.mubr.bf16.mxu0 0
    %998 = vmatmul.mubr.bf16.gmra.mrb[0].mxu0 %v780
    %v999 = vpop.f32.mrb[0].mxu0
    %v1000 = vadd.f32 %v787, %v999
    %v1001 = vpop.f32.mrb[0].mxu0
    %v1002 = vpop.f32.mrb[0].mxu0
    %v1003 = vadd.f32 %v787, %v1002
    %v1004 = vpop.f32.mrb[0].mxu0
    %1005 = vmatprep.mubr.bf16.mxu0 0
    %1006 = vmatmul.mubr.bf16.gmra.mrb[0].mxu0 %v781
    %v1007 = vpop.f32.mrb[0].mxu0
    %v1008 = vadd.f32 %v787, %v1007
    %v1009 = vpop.f32.mrb[0].mxu0
    %v1010 = vpop.f32.mrb[0].mxu0
    %v1011 = vadd.f32 %v787, %v1010
    %v1012 = vpop.f32.mrb[0].mxu0
    %1013 = vmatprep.mubr.bf16.mxu0 0
    %1014 = vmatmul.mubr.bf16.gmra.mrb[0].mxu0 %v782
    %v1015 = vpop.f32.mrb[0].mxu0
    %v1016 = vadd.f32 %v787, %v1015
    %v1017 = vpop.f32.mrb[0].mxu0
    %v1018 = vpop.f32.mrb[0].mxu0
    %v1019 = vadd.f32 %v787, %v1018
    %v1020 = vpop.f32.mrb[0].mxu0
    %1021 = vdwg.mxu0
    %v1022 = vmax.f32 %v872, 0.0
    %v1023 = vmax.f32 %v875, 0.0
    %v1024 = vmax.f32 %v880, 0.0
    %v1025 = vmax.f32 %v883, 0.0
    %v1026 = vmax.f32 %v888, 0.0
    %v1027 = vmax.f32 %v891, 0.0
    %v1028 = vmax.f32 %v896, 0.0
    %v1029 = vmax.f32 %v899, 0.0
    %v1030 = vmax.f32 %v904, 0.0
    %v1031 = vmax.f32 %v907, 0.0
    %v1032 = vmax.f32 %v912, 0.0
    %v1033 = vmax.f32 %v915, 0.0
    %v1034 = vmax.f32 %v920, 0.0
    %v1035 = vmax.f32 %v923, 0.0
    %v1036 = vmax.f32 %v928, 0.0
    %v1037 = vmax.f32 %v931, 0.0
    %v1038 = vmax.f32 %v936, 0.0
    %v1039 = vmax.f32 %v939, 0.0
    %v1040 = vmax.f32 %v944, 0.0
    %v1041 = vmax.f32 %v947, 0.0
    %v1042 = vmax.f32 %v952, 0.0
    %v1043 = vmax.f32 %v955, 0.0
    %v1044 = vmax.f32 %v960, 0.0
    %v1045 = vmax.f32 %v963, 0.0
    %v1046 = vmax.f32 %v968, 0.0
    %v1047 = vmax.f32 %v971, 0.0
    %v1048 = vmax.f32 %v976, 0.0
    %v1049 = vmax.f32 %v979, 0.0
    %v1050 = vmax.f32 %v984, 0.0
    %v1051 = vmax.f32 %v987, 0.0
    %v1052 = vmax.f32 %v992, 0.0
    %v1053 = vmax.f32 %v995, 0.0
    %v1054 = vmax.f32 %v1000, 0.0
    %v1055 = vmax.f32 %v1003, 0.0
    %v1056 = vmax.f32 %v1008, 0.0
    %v1057 = vmax.f32 %v1011, 0.0
    %v1058 = vmax.f32 %v1016, 0.0
    %v1059 = vmax.f32 %v1019, 0.0
    %1060 = vst [vmem:[#allocation10] sm:$0xff] %v1022
    %1061 = vst [vmem:[#allocation10 + $0x8] sm:$0xff] %v1023
    %1062 = vst [vmem:[#allocation10 + $0x10] sm:$0xff] %v1024
    %1063 = vst [vmem:[#allocation10 + $0x18] sm:$0xff] %v1025
    %1064 = vst [vmem:[#allocation10 + $0x20] sm:$0xff] %v1026
    %1065 = vst [vmem:[#allocation10 + $0x28] sm:$0xff] %v1027
    %1066 = vst [vmem:[#allocation10 + $0x30] sm:$0xff] %v1028
    %1067 = vst [vmem:[#allocation10 + $0x38] sm:$0xff] %v1029
    %1068 = vst [vmem:[#allocation10 + $0x40] sm:$0xff] %v1030
    %1069 = vst [vmem:[#allocation10 + $0x48] sm:$0xff] %v1031
    %1070 = vst [vmem:[#allocation10 + $0x50] sm:$0xff] %v1032
    %1071 = vst [vmem:[#allocation10 + $0x58] sm:$0xff] %v1033
    %1072 = vst [vmem:[#allocation10 + $0x60] sm:$0xff] %v1034
    %1073 = vst [vmem:[#allocation10 + $0x68] sm:$0xff] %v1035
    %1074 = vst [vmem:[#allocation10 + $0x70] sm:$0xff] %v1036
    %1075 = vst [vmem:[#allocation10 + $0x78] sm:$0xff] %v1037
    %1076 = vst [vmem:[#allocation10 + $0x80] sm:$0xff] %v1038
    %1077 = vst [vmem:[#allocation10 + $0x88] sm:$0xff] %v1039
    %1078 = vst [vmem:[#allocation10 + $0x90] sm:$0xff] %v1040
    %1079 = vst [vmem:[#allocation10 + $0x98] sm:$0xff] %v1041
    %1080 = vst [vmem:[#allocation10 + $0xa0] sm:$0xff] %v1042
    %1081 = vst [vmem:[#allocation10 + $0xa8] sm:$0xff] %v1043
    %1082 = vst [vmem:[#allocation10 + $0xb0] sm:$0xff] %v1044
    %1083 = vst [vmem:[#allocation10 + $0xb8] sm:$0xff] %v1045
    %1084 = vst [vmem:[#allocation10 + $0xc0] sm:$0xff] %v1046
    %1085 = vst [vmem:[#allocation10 + $0xc8] sm:$0xff] %v1047
    %1086 = vst [vmem:[#allocation10 + $0xd0] sm:$0xff] %v1048
    %1087 = vst [vmem:[#allocation10 + $0xd8] sm:$0xff] %v1049
    %1088 = vst [vmem:[#allocation10 + $0xe0] sm:$0xff] %v1050
    %1089 = vst [vmem:[#allocation10 + $0xe8] sm:$0xff] %v1051
    %1090 = vst [vmem:[#allocation10 + $0xf0] sm:$0xff] %v1052
    %1091 = vst [vmem:[#allocation10 + $0xf8] sm:$0xff] %v1053
    %1092 = vst [vmem:[#allocation10 + $0x100] sm:$0xff] %v1054
    %1093 = vst [vmem:[#allocation10 + $0x108] sm:$0xff] %v1055
    %1094 = vst [vmem:[#allocation10 + $0x110] sm:$0xff] %v1056
    %1095 = vst [vmem:[#allocation10 + $0x118] sm:$0xff] %v1057
    %1096 = vst [vmem:[#allocation10 + $0x120] sm:$0xff] %v1058
    %1097 = vst [vmem:[#allocation10 + $0x128] sm:$0xff] %v1059
    // Predicated region
    $region46: #{tpu_custom_call.1} parent=1 // pred_check
      _
    $region47: #{tpu_custom_call.1} parent=1 // pred_check_branch
      %1099 = sbr.rel (0) target = $region49
    $region48: #{tpu_custom_call.1} parent=1 // pred_region
      %s1101 = ssub.s32 4864, 4864
      %1102 = vsyncadd [#allocation4], %s1101
      %s1103 = sshll.u32 [#allocation10], 4
      %s1104 = int_to_ptr.vmem [resolvable:$true] %s1103
      %1109 = dma.vmem_to_hbm [thread:$0]  %s1104, 4864, %s7, [#allocation4], 128, 128, 8
    $region49: #{tpu_custom_call.1} parent=1 // pred_fallthru
      _
    // Predicated region
    $region50: #{tpu_custom_call.1} parent=1 // pred_check
      _
    $region51: #{tpu_custom_call.1} parent=1 // pred_check_branch
      %1111 = sbr.rel (0) target = $region53
    $region52: #{tpu_custom_call.1} parent=1 // pred_region
      %1112 = dma.done [#allocation4], 4864
    $region53: #{tpu_custom_call.1} parent=1 // pred_fallthru
      _
    %1113 = vsyncpa [#allocation3], 1
    %1114 = vsyncpa [#allocation6], 1
    %1115 = vsyncpa [#allocation9], 1
    %1116 = vsyncpa [#allocation4], 1

// kernel: tpu_custom_call.1
$region0: #{tpu_custom_call.1}
  #allocation0 [shape = 'u32[]', space=smem, size = 0x4, offset = 0x4, fixed_abs, tag = 'smem constant byte address 0x4 - core index']
  #allocation1 [shape = 'u32[144,128]{1,0:T(1,128)}', space=vmem, size = 0x12000, scoped, tag = 'internal scratch']
  %s0 = inlined_call_operand.hbm [shape: f32[304,128], index: 0, kind: input, shape index: {}]
  %s1 = inlined_call_operand.hbm [shape: bf16[128,128], index: 1, kind: input, shape index: {}]
  %s2 = inlined_call_operand.vmem [shape: f32[1,128], index: 2, kind: input, shape index: {}]
  %s3 = inlined_call_operand.hbm [shape: bf16[128,128], index: 3, kind: input, shape index: {}]
  %s4 = inlined_call_operand.vmem [shape: f32[1,128], index: 4, kind: input, shape index: {}]
  %s5 = inlined_call_operand.hbm [shape: bf16[128,128], index: 5, kind: input, shape index: {}]
  %s6 = inlined_call_operand.vmem [shape: f32[1,128], index: 6, kind: input, shape index: {}]
  %s7 = inlined_call_operand.hbm [shape: f32[304,128], index: 7, kind: output, shape index: {}]
  %s8 = sld [smem:[#allocation0]]
  $region54: #{tpu_custom_call.1} parent=0
    _
  %s10 = ssub.s32 1, %s8
  %s11 = scalar_select 0, %s10, %s8
  $region1: #{tpu_custom_call.1} parent=0
    #allocation2 [shape = 'u8[155648]{0}', space=vmem, size = 0x26000, scoped, tag = 'input window, operand 0, single buffered']
    #allocation3 [shape = 's32[1]{0}', space=sflag, size = 0x4, scoped, tag = 'scoped memory for tpu_custom_call.1']
    #allocation4 [shape = 's32[1]{0}', space=sflag, size = 0x4, scoped, tag = 'scoped memory for tpu_custom_call.1']
    #allocation5 [shape = 'u8[32768]{0}', space=vmem, size = 0x8000, scoped, tag = 'input window, operand 1, single buffered']
    #allocation6 [shape = 's32[1]{0}', space=sflag, size = 0x4, scoped, tag = 'scoped memory for tpu_custom_call.1']
    #allocation7 [shape = 'u8[32768]{0}', space=vmem, size = 0x8000, scoped, tag = 'input window, operand 3, single buffered']
    #allocation8 [shape = 'u8[32768]{0}', space=vmem, size = 0x8000, scoped, tag = 'input window, operand 5, single buffered']
    #allocation9 [shape = 's32[1]{0}', space=sflag, size = 0x4, scoped, tag = 'scoped memory for tpu_custom_call.1']
    #allocation10 [shape = 'u8[155648]{0}', space=vmem, size = 0x26000, scoped, tag = 'output window, operand 0, single buffered']
    %12 = vsyncpa [#allocation3], 0
    %13 = vsyncpa [#allocation6], 0
    %14 = vsyncpa [#allocation9], 0
    %15 = vsyncpa [#allocation4], 0
    // Predicated region
    $region2: #{tpu_custom_call.1} parent=1 // pred_check
      _
    $region3: #{tpu_custom_call.1} parent=1 // pred_check_branch
      %17 = sbr.rel (0) target = $region5
    $region4: #{tpu_custom_call.1} parent=1 // pred_region
      %s19 = ssub.s32 4864, 4864
      %20 = vsyncadd [#allocation3], %s19
      %s21 = sshll.u32 [#allocation2], 4
      %s22 = int_to_ptr.vmem [resolvable:$true] %s21
      %27 = dma.hbm_to_vmem [thread:$0]  %s0, 4864, %s22, [#allocation3], 128, 128, 8
    $region5: #{tpu_custom_call.1} parent=1 // pred_fallthru
      _
    // Predicated region
    $region6: #{tpu_custom_call.1} parent=1 // pred_check
      _
    $region7: #{tpu_custom_call.1} parent=1 // pred_check_branch
      %29 = sbr.rel (0) target = $region9
    $region8: #{tpu_custom_call.1} parent=1 // pred_region
      %s31 = ssub.s32 1024, 1024
      %32 = vsyncadd [#allocation6], %s31
      %s33 = sshll.u32 [#allocation5], 4
      %s34 = int_to_ptr.vmem [resolvable:$true] %s33
      %39 = dma.hbm_to_vmem [thread:$0]  %s1, 1024, %s34, [#allocation6], 64, 64, 4
    $region9: #{tpu_custom_call.1} parent=1 // pred_fallthru
      _
    // Predicated region
    $region10: #{tpu_custom_call.1} parent=1 // pred_check
      _
    $region11: #{tpu_custom_call.1} parent=1 // pred_check_branch
      %41 = sbr.rel (0) target = $region13
    $region12: #{tpu_custom_call.1} parent=1 // pred_region
      _
    $region13: #{tpu_custom_call.1} parent=1 // pred_fallthru
      _
    // Predicated region
    $region14: #{tpu_custom_call.1} parent=1 // pred_check
      _
    $region15: #{tpu_custom_call.1} parent=1 // pred_check_branch
      %43 = sbr.rel (0) target = $region17
    $region16: #{tpu_custom_call.1} parent=1 // pred_region
      %s45 = ssub.s32 1024, 1024
      %46 = vsyncadd [#allocation6], %s45
      %s47 = sshll.u32 [#allocation7], 4
      %s48 = int_to_ptr.vmem [resolvable:$true] %s47
      %53 = dma.hbm_to_vmem [thread:$0]  %s3, 1024, %s48, [#allocation6], 64, 64, 4
    $region17: #{tpu_custom_call.1} parent=1 // pred_fallthru
      _
    // Predicated region
    $region18: #{tpu_custom_call.1} parent=1 // pred_check
      _
    $region19: #{tpu_custom_call.1} parent=1 // pred_check_branch
      %55 = sbr.rel (0) target = $region21
    $region20: #{tpu_custom_call.1} parent=1 // pred_region
      _
    $region21: #{tpu_custom_call.1} parent=1 // pred_fallthru
      _
    // Predicated region
    $region22: #{tpu_custom_call.1} parent=1 // pred_check
      _
    $region23: #{tpu_custom_call.1} parent=1 // pred_check_branch
      %57 = sbr.rel (0) target = $region25
    $region24: #{tpu_custom_call.1} parent=1 // pred_region
      %s59 = ssub.s32 1024, 1024
      %60 = vsyncadd [#allocation9], %s59
      %s61 = sshll.u32 [#allocation8], 4
      %s62 = int_to_ptr.vmem [resolvable:$true] %s61
      %67 = dma.hbm_to_vmem [thread:$0]  %s5, 1024, %s62, [#allocation9], 64, 64, 4
    $region25: #{tpu_custom_call.1} parent=1 // pred_fallthru
      _
    // Predicated region
    $region26: #{tpu_custom_call.1} parent=1 // pred_check
      _
    $region27: #{tpu_custom_call.1} parent=1 // pred_check_branch
      %69 = sbr.rel (0) target = $region29
    $region28: #{tpu_custom_call.1} parent=1 // pred_region
      _
    $region29: #{tpu_custom_call.1} parent=1 // pred_fallthru
      _
    // Predicated region
    $region30: #{tpu_custom_call.1} parent=1 // pred_check
      _
    $region31: #{tpu_custom_call.1} parent=1 // pred_check_branch
      %71 = sbr.rel (0) target = $region33
    $region32: #{tpu_custom_call.1} parent=1 // pred_region
      %72 = dma.done [#allocation3], 4864
    $region33: #{tpu_custom_call.1} parent=1 // pred_fallthru
      _
    // Predicated region
    $region34: #{tpu_custom_call.1} parent=1 // pred_check
      _
    $region35: #{tpu_custom_call.1} parent=1 // pred_check_branch
      %74 = sbr.rel (0) target = $region37
    $region36: #{tpu_custom_call.1} parent=1 // pred_region
      %75 = dma.done [#allocation6], 1024
    $region37: #{tpu_custom_call.1} parent=1 // pred_fallthru
      _
    // Predicated region
    $region38: #{tpu_custom_call.1} parent=1 // pred_check
      _
    $region39: #{tpu_custom_call.1} parent=1 // pred_check_branch
      %77 = sbr.rel (0) target = $region41
    $region40: #{tpu_custom_call.1} parent=1 // pred_region
      %78 = dma.done [#allocation6], 1024
    $region41: #{tpu_custom_call.1} parent=1 // pred_fallthru
      _
    // Predicated region
    $region42: #{tpu_custom_call.1} parent=1 // pred_check
      _
    $region43: #{tpu_custom_call.1} parent=1 // pred_check_branch
      %80 = sbr.rel (0) target = $region45
    $region44: #{tpu_custom_call.1} parent=1 // pred_region
      %81 = dma.done [#allocation9], 1024
    $region45: #{tpu_custom_call.1} parent=1 // pred_fallthru
      _
    %v83 = vld [vmem:[#allocation2] sm:$0xff]
    %v84 = vld [vmem:[#allocation2 + $0x8] sm:$0xff]
    %v85 = vld [vmem:[#allocation2 + $0x10] sm:$0xff]
    %v86 = vld [vmem:[#allocation2 + $0x18] sm:$0xff]
    %v87 = vld [vmem:[#allocation2 + $0x20] sm:$0xff]
    %v88 = vld [vmem:[#allocation2 + $0x28] sm:$0xff]
    %v89 = vld [vmem:[#allocation2 + $0x30] sm:$0xff]
    %v90 = vld [vmem:[#allocation2 + $0x38] sm:$0xff]
    %v91 = vld [vmem:[#allocation2 + $0x40] sm:$0xff]
    %v92 = vld [vmem:[#allocation2 + $0x48] sm:$0xff]
    %v93 = vld [vmem:[#allocation2 + $0x50] sm:$0xff]
    %v94 = vld [vmem:[#allocation2 + $0x58] sm:$0xff]
    %v95 = vld [vmem:[#allocation2 + $0x60] sm:$0xff]
    %v96 = vld [vmem:[#allocation2 + $0x68] sm:$0xff]
    %v97 = vld [vmem:[#allocation2 + $0x70] sm:$0xff]
    %v98 = vld [vmem:[#allocation2 + $0x78] sm:$0xff]
    %v99 = vld [vmem:[#allocation2 + $0x80] sm:$0xff]
    %v100 = vld [vmem:[#allocation2 + $0x88] sm:$0xff]
    %v101 = vld [vmem:[#allocation2 + $0x90] sm:$0xff]
    %v102 = vld [vmem:[#allocation2 + $0x98] sm:$0xff]
    %v103 = vld [vmem:[#allocation2 + $0xa0] sm:$0xff]
    %v104 = vld [vmem:[#allocation2 + $0xa8] sm:$0xff]
    %v105 = vld [vmem:[#allocation2 + $0xb0] sm:$0xff]
    %v106 = vld [vmem:[#allocation2 + $0xb8] sm:$0xff]
    %v107 = vld [vmem:[#allocation2 + $0xc0] sm:$0xff]
    %v108 = vld [vmem:[#allocation2 + $0xc8] sm:$0xff]
    %v109 = vld [vmem:[#allocation2 + $0xd0] sm:$0xff]
    %v110 = vld [vmem:[#allocation2 + $0xd8] sm:$0xff]
    %v111 = vld [vmem:[#allocation2 + $0xe0] sm:$0xff]
    %v112 = vld [vmem:[#allocation2 + $0xe8] sm:$0xff]
    %v113 = vld [vmem:[#allocation2 + $0xf0] sm:$0xff]
    %v114 = vld [vmem:[#allocation2 + $0xf8] sm:$0xff]
    %v115 = vld [vmem:[#allocation2 + $0x100] sm:$0xff]
    %v116 = vld [vmem:[#allocation2 + $0x108] sm:$0xff]
    %v117 = vld [vmem:[#allocation2 + $0x110] sm:$0xff]
    %v118 = vld [vmem:[#allocation2 + $0x118] sm:$0xff]
    %v119 = vld [vmem:[#allocation2 + $0x120] sm:$0xff]
    %v120 = vld [vmem:[#allocation2 + $0x128] sm:$0xff]
    %v121 = vld [vmem:[#allocation5] sm:$0xf]
    %v122 = vld [vmem:[#allocation5 + $0x4] sm:$0xf]
    %v123 = vld [vmem:[#allocation5 + $0x8] sm:$0xf]
    %v124 = vld [vmem:[#allocation5 + $0xc] sm:$0xf]
    %v125 = vld [vmem:[#allocation5 + $0x10] sm:$0xf]
    %v126 = vld [vmem:[#allocation5 + $0x14] sm:$0xf]
    %v127 = vld [vmem:[#allocation5 + $0x18] sm:$0xf]
    %v128 = vld [vmem:[#allocation5 + $0x1c] sm:$0xf]
    %v129 = vld [vmem:[#allocation5 + $0x20] sm:$0xf]
    %v130 = vld [vmem:[#allocation5 + $0x24] sm:$0xf]
    %v131 = vld [vmem:[#allocation5 + $0x28] sm:$0xf]
    %v132 = vld [vmem:[#allocation5 + $0x2c] sm:$0xf]
    %v133 = vld [vmem:[#allocation5 + $0x30] sm:$0xf]
    %v134 = vld [vmem:[#allocation5 + $0x34] sm:$0xf]
    %v135 = vld [vmem:[#allocation5 + $0x38] sm:$0xf]
    %v136 = vld [vmem:[#allocation5 + $0x3c] sm:$0xf]
    %v137 = vld [vmem:[%s2] sm:$0x1]
    %v138 = vpack.c.bf16 %v84, %v83
    %v139 = vpack.c.bf16 %v86, %v85
    %v140 = vpack.c.bf16 %v88, %v87
    %v141 = vpack.c.bf16 %v90, %v89
    %v142 = vpack.c.bf16 %v92, %v91
    %v143 = vpack.c.bf16 %v94, %v93
    %v144 = vpack.c.bf16 %v96, %v95
    %v145 = vpack.c.bf16 %v98, %v97
    %v146 = vpack.c.bf16 %v100, %v99
    %v147 = vpack.c.bf16 %v102, %v101
    %v148 = vpack.c.bf16 %v104, %v103
    %v149 = vpack.c.bf16 %v106, %v105
    %v150 = vpack.c.bf16 %v108, %v107
    %v151 = vpack.c.bf16 %v110, %v109
    %v152 = vpack.c.bf16 %v112, %v111
    %v153 = vpack.c.bf16 %v114, %v113
    %v154 = vpack.c.bf16 %v116, %v115
    %v155 = vpack.c.bf16 %v118, %v117
    %v156 = vpack.c.bf16 %v120, %v119
    %v158 = vlaneseq
    %v159 = vshrl.u32 %v158, 7
    %v160 = vsub.s32 0, %v159
    %v161 = vrot.slane %v137, %v160
    %v179 = vunpack.c.l.b16 %v121
    %v180 = vunpack.c.l.b16 %v122
    %v181 = vunpack.c.l.b16 %v123
    %v182 = vunpack.c.l.b16 %v124
    %v183 = vunpack.c.l.b16 %v125
    %v184 = vunpack.c.l.b16 %v126
    %v185 = vunpack.c.l.b16 %v127
    %v186 = vunpack.c.l.b16 %v128
    %v187 = vunpack.c.l.b16 %v129
    %v188 = vunpack.c.l.b16 %v130
    %v189 = vunpack.c.l.b16 %v131
    %v190 = vunpack.c.l.b16 %v132
    %v191 = vunpack.c.l.b16 %v133
    %v192 = vunpack.c.l.b16 %v134
    %v193 = vunpack.c.l.b16 %v135
    %v194 = vunpack.c.l.b16 %v136
    %v195 = vpack.c.b16 %v180, %v179
    %v196 = vpack.c.b16 %v182, %v181
    %v197 = vpack.c.b16 %v184, %v183
    %v198 = vpack.c.b16 %v186, %v185
    %v199 = vpack.c.b16 %v188, %v187
    %v200 = vpack.c.b16 %v190, %v189
    %v201 = vpack.c.b16 %v192, %v191
    %v202 = vpack.c.b16 %v194, %v193
    %211 = vmatprep.subr.bf16.mxu0 0
    %212 = vmatpush1.bf16.msra.mxu0 %v195
    %213 = vmatprep.subr.bf16.mxu0 0
    %214 = vmatpush1.bf16.msra.mxu0 %v196
    %215 = vmatprep.subr.bf16.mxu0 0
    %216 = vmatpush1.bf16.msra.mxu0 %v197
    %217 = vmatprep.subr.bf16.mxu0 0
    %218 = vmatpush1.bf16.msra.mxu0 %v198
    %219 = vmatprep.subr.bf16.mxu0 0
    %220 = vmatpush1.bf16.msra.mxu0 %v199
    %221 = vmatprep.subr.bf16.mxu0 0
    %222 = vmatpush1.bf16.msra.mxu0 %v200
    %223 = vmatprep.subr.bf16.mxu0 0
    %224 = vmatpush1.bf16.msra.mxu0 %v201
    %225 = vmatprep.subr.bf16.mxu0 0
    %226 = vmatpush1.bf16.msra.mxu0 %v202
    %227 = vmatprep.subr.bf16.mxu0 0
    %228 = vmatpush1.bf16.msra.mxu0 0
    %229 = vmatprep.subr.bf16.mxu0 0
    %230 = vmatpush1.bf16.msra.mxu0 0
    %231 = vmatprep.subr.bf16.mxu0 0
    %232 = vmatpush1.bf16.msra.mxu0 0
    %233 = vmatprep.subr.bf16.mxu0 0
    %234 = vmatpush1.bf16.msra.mxu0 0
    %235 = vmatprep.subr.bf16.mxu0 0
    %236 = vmatpush1.bf16.msra.mxu0 0
    %237 = vmatprep.subr.bf16.mxu0 0
    %238 = vmatpush1.bf16.msra.mxu0 0
    %239 = vmatprep.subr.bf16.mxu0 0
    %240 = vmatpush1.bf16.msra.mxu0 0
    %241 = vmatprep.subr.bf16.mxu0 0
    %242 = vmatpush1.bf16.msra.mxu0 0
    %243 = vmatprep.mubr.bf16.mxu0 0
    %244 = vmatmul.mubr.bf16.gmra.mrb[0].mxu0 %v138
    %v245 = vpop.f32.mrb[0].mxu0
    %v246 = vadd.f32 %v161, %v245
    %v247 = vpop.f32.mrb[0].mxu0
    %v248 = vpop.f32.mrb[0].mxu0
    %v249 = vadd.f32 %v161, %v248
    %v250 = vpop.f32.mrb[0].mxu0
    %251 = vmatprep.mubr.bf16.mxu0 0
    %252 = vmatmul.mubr.bf16.gmra.mrb[0].mxu0 %v139
    %v253 = vpop.f32.mrb[0].mxu0
    %v254 = vadd.f32 %v161, %v253
    %v255 = vpop.f32.mrb[0].mxu0
    %v256 = vpop.f32.mrb[0].mxu0
    %v257 = vadd.f32 %v161, %v256
    %v258 = vpop.f32.mrb[0].mxu0
    %259 = vmatprep.mubr.bf16.mxu0 0
    %260 = vmatmul.mubr.bf16.gmra.mrb[0].mxu0 %v140
    %v261 = vpop.f32.mrb[0].mxu0
    %v262 = vadd.f32 %v161, %v261
    %v263 = vpop.f32.mrb[0].mxu0
    %v264 = vpop.f32.mrb[0].mxu0
    %v265 = vadd.f32 %v161, %v264
    %v266 = vpop.f32.mrb[0].mxu0
    %267 = vmatprep.mubr.bf16.mxu0 0
    %268 = vmatmul.mubr.bf16.gmra.mrb[0].mxu0 %v141
    %v269 = vpop.f32.mrb[0].mxu0
    %v270 = vadd.f32 %v161, %v269
    %v271 = vpop.f32.mrb[0].mxu0
    %v272 = vpop.f32.mrb[0].mxu0
    %v273 = vadd.f32 %v161, %v272
    %v274 = vpop.f32.mrb[0].mxu0
    %275 = vmatprep.mubr.bf16.mxu0 0
    %276 = vmatmul.mubr.bf16.gmra.mrb[0].mxu0 %v142
    %v277 = vpop.f32.mrb[0].mxu0
    %v278 = vadd.f32 %v161, %v277
    %v279 = vpop.f32.mrb[0].mxu0
    %v280 = vpop.f32.mrb[0].mxu0
    %v281 = vadd.f32 %v161, %v280
    %v282 = vpop.f32.mrb[0].mxu0
    %283 = vmatprep.mubr.bf16.mxu0 0
    %284 = vmatmul.mubr.bf16.gmra.mrb[0].mxu0 %v143
    %v285 = vpop.f32.mrb[0].mxu0
    %v286 = vadd.f32 %v161, %v285
    %v287 = vpop.f32.mrb[0].mxu0
    %v288 = vpop.f32.mrb[0].mxu0
    %v289 = vadd.f32 %v161, %v288
    %v290 = vpop.f32.mrb[0].mxu0
    %291 = vmatprep.mubr.bf16.mxu0 0
    %292 = vmatmul.mubr.bf16.gmra.mrb[0].mxu0 %v144
    %v293 = vpop.f32.mrb[0].mxu0
    %v294 = vadd.f32 %v161, %v293
    %v295 = vpop.f32.mrb[0].mxu0
    %v296 = vpop.f32.mrb[0].mxu0
    %v297 = vadd.f32 %v161, %v296
    %v298 = vpop.f32.mrb[0].mxu0
    %299 = vmatprep.mubr.bf16.mxu0 0
    %300 = vmatmul.mubr.bf16.gmra.mrb[0].mxu0 %v145
    %v301 = vpop.f32.mrb[0].mxu0
    %v302 = vadd.f32 %v161, %v301
    %v303 = vpop.f32.mrb[0].mxu0
    %v304 = vpop.f32.mrb[0].mxu0
    %v305 = vadd.f32 %v161, %v304
    %v306 = vpop.f32.mrb[0].mxu0
    %307 = vmatprep.mubr.bf16.mxu0 0
    %308 = vmatmul.mubr.bf16.gmra.mrb[0].mxu0 %v146
    %v309 = vpop.f32.mrb[0].mxu0
    %v310 = vadd.f32 %v161, %v309
    %v311 = vpop.f32.mrb[0].mxu0
    %v312 = vpop.f32.mrb[0].mxu0
    %v313 = vadd.f32 %v161, %v312
    %v314 = vpop.f32.mrb[0].mxu0
    %315 = vmatprep.mubr.bf16.mxu0 0
    %316 = vmatmul.mubr.bf16.gmra.mrb[0].mxu0 %v147
    %v317 = vpop.f32.mrb[0].mxu0
    %v318 = vadd.f32 %v161, %v317
    %v319 = vpop.f32.mrb[0].mxu0
    %v320 = vpop.f32.mrb[0].mxu0
    %v321 = vadd.f32 %v161, %v320
    %v322 = vpop.f32.mrb[0].mxu0
    %323 = vmatprep.mubr.bf16.mxu0 0
    %324 = vmatmul.mubr.bf16.gmra.mrb[0].mxu0 %v148
    %v325 = vpop.f32.mrb[0].mxu0
    %v326 = vadd.f32 %v161, %v325
    %v327 = vpop.f32.mrb[0].mxu0
    %v328 = vpop.f32.mrb[0].mxu0
    %v329 = vadd.f32 %v161, %v328
    %v330 = vpop.f32.mrb[0].mxu0
    %331 = vmatprep.mubr.bf16.mxu0 0
    %332 = vmatmul.mubr.bf16.gmra.mrb[0].mxu0 %v149
    %v333 = vpop.f32.mrb[0].mxu0
    %v334 = vadd.f32 %v161, %v333
    %v335 = vpop.f32.mrb[0].mxu0
    %v336 = vpop.f32.mrb[0].mxu0
    %v337 = vadd.f32 %v161, %v336
    %v338 = vpop.f32.mrb[0].mxu0
    %339 = vmatprep.mubr.bf16.mxu0 0
    %340 = vmatmul.mubr.bf16.gmra.mrb[0].mxu0 %v150
    %v341 = vpop.f32.mrb[0].mxu0
    %v342 = vadd.f32 %v161, %v341
    %v343 = vpop.f32.mrb[0].mxu0
    %v344 = vpop.f32.mrb[0].mxu0
    %v345 = vadd.f32 %v161, %v344
    %v346 = vpop.f32.mrb[0].mxu0
    %347 = vmatprep.mubr.bf16.mxu0 0
    %348 = vmatmul.mubr.bf16.gmra.mrb[0].mxu0 %v151
    %v349 = vpop.f32.mrb[0].mxu0
    %v350 = vadd.f32 %v161, %v349
    %v351 = vpop.f32.mrb[0].mxu0
    %v352 = vpop.f32.mrb[0].mxu0
    %v353 = vadd.f32 %v161, %v352
    %v354 = vpop.f32.mrb[0].mxu0
    %355 = vmatprep.mubr.bf16.mxu0 0
    %356 = vmatmul.mubr.bf16.gmra.mrb[0].mxu0 %v152
    %v357 = vpop.f32.mrb[0].mxu0
    %v358 = vadd.f32 %v161, %v357
    %v359 = vpop.f32.mrb[0].mxu0
    %v360 = vpop.f32.mrb[0].mxu0
    %v361 = vadd.f32 %v161, %v360
    %v362 = vpop.f32.mrb[0].mxu0
    %363 = vmatprep.mubr.bf16.mxu0 0
    %364 = vmatmul.mubr.bf16.gmra.mrb[0].mxu0 %v153
    %v365 = vpop.f32.mrb[0].mxu0
    %v366 = vadd.f32 %v161, %v365
    %v367 = vpop.f32.mrb[0].mxu0
    %v368 = vpop.f32.mrb[0].mxu0
    %v369 = vadd.f32 %v161, %v368
    %v370 = vpop.f32.mrb[0].mxu0
    %371 = vmatprep.mubr.bf16.mxu0 0
    %372 = vmatmul.mubr.bf16.gmra.mrb[0].mxu0 %v154
    %v373 = vpop.f32.mrb[0].mxu0
    %v374 = vadd.f32 %v161, %v373
    %v375 = vpop.f32.mrb[0].mxu0
    %v376 = vpop.f32.mrb[0].mxu0
    %v377 = vadd.f32 %v161, %v376
    %v378 = vpop.f32.mrb[0].mxu0
    %379 = vmatprep.mubr.bf16.mxu0 0
    %380 = vmatmul.mubr.bf16.gmra.mrb[0].mxu0 %v155
    %v381 = vpop.f32.mrb[0].mxu0
    %v382 = vadd.f32 %v161, %v381
    %v383 = vpop.f32.mrb[0].mxu0
    %v384 = vpop.f32.mrb[0].mxu0
    %v385 = vadd.f32 %v161, %v384
    %v386 = vpop.f32.mrb[0].mxu0
    %387 = vmatprep.mubr.bf16.mxu0 0
    %388 = vmatmul.mubr.bf16.gmra.mrb[0].mxu0 %v156
    %v389 = vpop.f32.mrb[0].mxu0
    %v390 = vadd.f32 %v161, %v389
    %v391 = vpop.f32.mrb[0].mxu0
    %v392 = vpop.f32.mrb[0].mxu0
    %v393 = vadd.f32 %v161, %v392
    %v394 = vpop.f32.mrb[0].mxu0
    %395 = vdwg.mxu0
    %v396 = vmax.f32 %v246, 0.0
    %v397 = vmax.f32 %v249, 0.0
    %v398 = vmax.f32 %v254, 0.0
    %v399 = vmax.f32 %v257, 0.0
    %v400 = vmax.f32 %v262, 0.0
    %v401 = vmax.f32 %v265, 0.0
    %v402 = vmax.f32 %v270, 0.0
    %v403 = vmax.f32 %v273, 0.0
    %v404 = vmax.f32 %v278, 0.0
    %v405 = vmax.f32 %v281, 0.0
    %v406 = vmax.f32 %v286, 0.0
    %v407 = vmax.f32 %v289, 0.0
    %v408 = vmax.f32 %v294, 0.0
    %v409 = vmax.f32 %v297, 0.0
    %v410 = vmax.f32 %v302, 0.0
    %v411 = vmax.f32 %v305, 0.0
    %v412 = vmax.f32 %v310, 0.0
    %v413 = vmax.f32 %v313, 0.0
    %v414 = vmax.f32 %v318, 0.0
    %v415 = vmax.f32 %v321, 0.0
    %v416 = vmax.f32 %v326, 0.0
    %v417 = vmax.f32 %v329, 0.0
    %v418 = vmax.f32 %v334, 0.0
    %v419 = vmax.f32 %v337, 0.0
    %v420 = vmax.f32 %v342, 0.0
    %v421 = vmax.f32 %v345, 0.0
    %v422 = vmax.f32 %v350, 0.0
    %v423 = vmax.f32 %v353, 0.0
    %v424 = vmax.f32 %v358, 0.0
    %v425 = vmax.f32 %v361, 0.0
    %v426 = vmax.f32 %v366, 0.0
    %v427 = vmax.f32 %v369, 0.0
    %v428 = vmax.f32 %v374, 0.0
    %v429 = vmax.f32 %v377, 0.0
    %v430 = vmax.f32 %v382, 0.0
    %v431 = vmax.f32 %v385, 0.0
    %v432 = vmax.f32 %v390, 0.0
    %v433 = vmax.f32 %v393, 0.0
    %v434 = vld [vmem:[#allocation7] sm:$0xf]
    %v435 = vld [vmem:[#allocation7 + $0x4] sm:$0xf]
    %v436 = vld [vmem:[#allocation7 + $0x8] sm:$0xf]
    %v437 = vld [vmem:[#allocation7 + $0xc] sm:$0xf]
    %v438 = vld [vmem:[#allocation7 + $0x10] sm:$0xf]
    %v439 = vld [vmem:[#allocation7 + $0x14] sm:$0xf]
    %v440 = vld [vmem:[#allocation7 + $0x18] sm:$0xf]
    %v441 = vld [vmem:[#allocation7 + $0x1c] sm:$0xf]
    %v442 = vld [vmem:[#allocation7 + $0x20] sm:$0xf]
    %v443 = vld [vmem:[#allocation7 + $0x24] sm:$0xf]
    %v444 = vld [vmem:[#allocation7 + $0x28] sm:$0xf]
    %v445 = vld [vmem:[#allocation7 + $0x2c] sm:$0xf]
    %v446 = vld [vmem:[#allocation7 + $0x30] sm:$0xf]
    %v447 = vld [vmem:[#allocation7 + $0x34] sm:$0xf]
    %v448 = vld [vmem:[#allocation7 + $0x38] sm:$0xf]
    %v449 = vld [vmem:[#allocation7 + $0x3c] sm:$0xf]
    %v450 = vld [vmem:[%s4] sm:$0x1]
    %v451 = vpack.c.bf16 %v397, %v396
    %v452 = vpack.c.bf16 %v399, %v398
    %v453 = vpack.c.bf16 %v401, %v400
    %v454 = vpack.c.bf16 %v403, %v402
    %v455 = vpack.c.bf16 %v405, %v404
    %v456 = vpack.c.bf16 %v407, %v406
    %v457 = vpack.c.bf16 %v409, %v408
    %v458 = vpack.c.bf16 %v411, %v410
    %v459 = vpack.c.bf16 %v413, %v412
    %v460 = vpack.c.bf16 %v415, %v414
    %v461 = vpack.c.bf16 %v417, %v416
    %v462 = vpack.c.bf16 %v419, %v418
    %v463 = vpack.c.bf16 %v421, %v420
    %v464 = vpack.c.bf16 %v423, %v422
    %v465 = vpack.c.bf16 %v425, %v424
    %v466 = vpack.c.bf16 %v427, %v426
    %v467 = vpack.c.bf16 %v429, %v428
    %v468 = vpack.c.bf16 %v431, %v430
    %v469 = vpack.c.bf16 %v433, %v432
    %v471 = vlaneseq
    %v472 = vshrl.u32 %v471, 7
    %v473 = vsub.s32 0, %v472
    %v474 = vrot.slane %v450, %v473
    %v492 = vunpack.c.l.b16 %v434
    %v493 = vunpack.c.l.b16 %v435
    %v494 = vunpack.c.l.b16 %v436
    %v495 = vunpack.c.l.b16 %v437
    %v496 = vunpack.c.l.b16 %v438
    %v497 = vunpack.c.l.b16 %v439
    %v498 = vunpack.c.l.b16 %v440
    %v499 = vunpack.c.l.b16 %v441
    %v500 = vunpack.c.l.b16 %v442
    %v501 = vunpack.c.l.b16 %v443
    %v502 = vunpack.c.l.b16 %v444
    %v503 = vunpack.c.l.b16 %v445
    %v504 = vunpack.c.l.b16 %v446
    %v505 = vunpack.c.l.b16 %v447
    %v506 = vunpack.c.l.b16 %v448
    %v507 = vunpack.c.l.b16 %v449
    %v508 = vpack.c.b16 %v493, %v492
    %v509 = vpack.c.b16 %v495, %v494
    %v510 = vpack.c.b16 %v497, %v496
    %v511 = vpack.c.b16 %v499, %v498
    %v512 = vpack.c.b16 %v501, %v500
    %v513 = vpack.c.b16 %v503, %v502
    %v514 = vpack.c.b16 %v505, %v504
    %v515 = vpack.c.b16 %v507, %v506
    %524 = vmatprep.subr.bf16.mxu0 0
    %525 = vmatpush1.bf16.msra.mxu0 %v508
    %526 = vmatprep.subr.bf16.mxu0 0
    %527 = vmatpush1.bf16.msra.mxu0 %v509
    %528 = vmatprep.subr.bf16.mxu0 0
    %529 = vmatpush1.bf16.msra.mxu0 %v510
    %530 = vmatprep.subr.bf16.mxu0 0
    %531 = vmatpush1.bf16.msra.mxu0 %v511
    %532 = vmatprep.subr.bf16.mxu0 0
    %533 = vmatpush1.bf16.msra.mxu0 %v512
    %534 = vmatprep.subr.bf16.mxu0 0
    %535 = vmatpush1.bf16.msra.mxu0 %v513
    %536 = vmatprep.subr.bf16.mxu0 0
    %537 = vmatpush1.bf16.msra.mxu0 %v514
    %538 = vmatprep.subr.bf16.mxu0 0
    %539 = vmatpush1.bf16.msra.mxu0 %v515
    %540 = vmatprep.subr.bf16.mxu0 0
    %541 = vmatpush1.bf16.msra.mxu0 0
    %542 = vmatprep.subr.bf16.mxu0 0
    %543 = vmatpush1.bf16.msra.mxu0 0
    %544 = vmatprep.subr.bf16.mxu0 0
    %545 = vmatpush1.bf16.msra.mxu0 0
    %546 = vmatprep.subr.bf16.mxu0 0
    %547 = vmatpush1.bf16.msra.mxu0 0
    %548 = vmatprep.subr.bf16.mxu0 0
    %549 = vmatpush1.bf16.msra.mxu0 0
    %550 = vmatprep.subr.bf16.mxu0 0
    %551 = vmatpush1.bf16.msra.mxu0 0
    %552 = vmatprep.subr.bf16.mxu0 0
    %553 = vmatpush1.bf16.msra.mxu0 0
    %554 = vmatprep.subr.bf16.mxu0 0
    %555 = vmatpush1.bf16.msra.mxu0 0
    %556 = vmatprep.mubr.bf16.mxu0 0
    %557 = vmatmul.mubr.bf16.gmra.mrb[0].mxu0 %v451
    %v558 = vpop.f32.mrb[0].mxu0
    %v559 = vadd.f32 %v474, %v558
    %v560 = vpop.f32.mrb[0].mxu0
    %v561 = vpop.f32.mrb[0].mxu0
    %v562 = vadd.f32 %v474, %v561
    %v563 = vpop.f32.mrb[0].mxu0
    %564 = vmatprep.mubr.bf16.mxu0 0
    %565 = vmatmul.mubr.bf16.gmra.mrb[0].mxu0 %v452
    %v566 = vpop.f32.mrb[0].mxu0
    %v567 = vadd.f32 %v474, %v566
    %v568 = vpop.f32.mrb[0].mxu0
    %v569 = vpop.f32.mrb[0].mxu0
    %v570 = vadd.f32 %v474, %v569
    %v571 = vpop.f32.mrb[0].mxu0
    %572 = vmatprep.mubr.bf16.mxu0 0
    %573 = vmatmul.mubr.bf16.gmra.mrb[0].mxu0 %v453
    %v574 = vpop.f32.mrb[0].mxu0
    %v575 = vadd.f32 %v474, %v574
    %v576 = vpop.f32.mrb[0].mxu0
    %v577 = vpop.f32.mrb[0].mxu0
    %v578 = vadd.f32 %v474, %v577
    %v579 = vpop.f32.mrb[0].mxu0
    %580 = vmatprep.mubr.bf16.mxu0 0
    %581 = vmatmul.mubr.bf16.gmra.mrb[0].mxu0 %v454
    %v582 = vpop.f32.mrb[0].mxu0
    %v583 = vadd.f32 %v474, %v582
    %v584 = vpop.f32.mrb[0].mxu0
    %v585 = vpop.f32.mrb[0].mxu0
    %v586 = vadd.f32 %v474, %v585
    %v587 = vpop.f32.mrb[0].mxu0
    %588 = vmatprep.mubr.bf16.mxu0 0
    %589 = vmatmul.mubr.bf16.gmra.mrb[0].mxu0 %v455
    %v590 = vpop.f32.mrb[0].mxu0
    %v591 = vadd.f32 %v474, %v590
    %v592 = vpop.f32.mrb[0].mxu0
    %v593 = vpop.f32.mrb[0].mxu0
    %v594 = vadd.f32 %v474, %v593
    %v595 = vpop.f32.mrb[0].mxu0
    %596 = vmatprep.mubr.bf16.mxu0 0
    %597 = vmatmul.mubr.bf16.gmra.mrb[0].mxu0 %v456
    %v598 = vpop.f32.mrb[0].mxu0
    %v599 = vadd.f32 %v474, %v598
    %v600 = vpop.f32.mrb[0].mxu0
    %v601 = vpop.f32.mrb[0].mxu0
    %v602 = vadd.f32 %v474, %v601
    %v603 = vpop.f32.mrb[0].mxu0
    %604 = vmatprep.mubr.bf16.mxu0 0
    %605 = vmatmul.mubr.bf16.gmra.mrb[0].mxu0 %v457
    %v606 = vpop.f32.mrb[0].mxu0
    %v607 = vadd.f32 %v474, %v606
    %v608 = vpop.f32.mrb[0].mxu0
    %v609 = vpop.f32.mrb[0].mxu0
    %v610 = vadd.f32 %v474, %v609
    %v611 = vpop.f32.mrb[0].mxu0
    %612 = vmatprep.mubr.bf16.mxu0 0
    %613 = vmatmul.mubr.bf16.gmra.mrb[0].mxu0 %v458
    %v614 = vpop.f32.mrb[0].mxu0
    %v615 = vadd.f32 %v474, %v614
    %v616 = vpop.f32.mrb[0].mxu0
    %v617 = vpop.f32.mrb[0].mxu0
    %v618 = vadd.f32 %v474, %v617
    %v619 = vpop.f32.mrb[0].mxu0
    %620 = vmatprep.mubr.bf16.mxu0 0
    %621 = vmatmul.mubr.bf16.gmra.mrb[0].mxu0 %v459
    %v622 = vpop.f32.mrb[0].mxu0
    %v623 = vadd.f32 %v474, %v622
    %v624 = vpop.f32.mrb[0].mxu0
    %v625 = vpop.f32.mrb[0].mxu0
    %v626 = vadd.f32 %v474, %v625
    %v627 = vpop.f32.mrb[0].mxu0
    %628 = vmatprep.mubr.bf16.mxu0 0
    %629 = vmatmul.mubr.bf16.gmra.mrb[0].mxu0 %v460
    %v630 = vpop.f32.mrb[0].mxu0
    %v631 = vadd.f32 %v474, %v630
    %v632 = vpop.f32.mrb[0].mxu0
    %v633 = vpop.f32.mrb[0].mxu0
    %v634 = vadd.f32 %v474, %v633
    %v635 = vpop.f32.mrb[0].mxu0
    %636 = vmatprep.mubr.bf16.mxu0 0
    %637 = vmatmul.mubr.bf16.gmra.mrb[0].mxu0 %v461
    %v638 = vpop.f32.mrb[0].mxu0
    %v639 = vadd.f32 %v474, %v638
    %v640 = vpop.f32.mrb[0].mxu0
    %v641 = vpop.f32.mrb[0].mxu0
    %v642 = vadd.f32 %v474, %v641
    %v643 = vpop.f32.mrb[0].mxu0
    %644 = vmatprep.mubr.bf16.mxu0 0
    %645 = vmatmul.mubr.bf16.gmra.mrb[0].mxu0 %v462
    %v646 = vpop.f32.mrb[0].mxu0
    %v647 = vadd.f32 %v474, %v646
    %v648 = vpop.f32.mrb[0].mxu0
    %v649 = vpop.f32.mrb[0].mxu0
    %v650 = vadd.f32 %v474, %v649
    %v651 = vpop.f32.mrb[0].mxu0
    %652 = vmatprep.mubr.bf16.mxu0 0
    %653 = vmatmul.mubr.bf16.gmra.mrb[0].mxu0 %v463
    %v654 = vpop.f32.mrb[0].mxu0
    %v655 = vadd.f32 %v474, %v654
    %v656 = vpop.f32.mrb[0].mxu0
    %v657 = vpop.f32.mrb[0].mxu0
    %v658 = vadd.f32 %v474, %v657
    %v659 = vpop.f32.mrb[0].mxu0
    %660 = vmatprep.mubr.bf16.mxu0 0
    %661 = vmatmul.mubr.bf16.gmra.mrb[0].mxu0 %v464
    %v662 = vpop.f32.mrb[0].mxu0
    %v663 = vadd.f32 %v474, %v662
    %v664 = vpop.f32.mrb[0].mxu0
    %v665 = vpop.f32.mrb[0].mxu0
    %v666 = vadd.f32 %v474, %v665
    %v667 = vpop.f32.mrb[0].mxu0
    %668 = vmatprep.mubr.bf16.mxu0 0
    %669 = vmatmul.mubr.bf16.gmra.mrb[0].mxu0 %v465
    %v670 = vpop.f32.mrb[0].mxu0
    %v671 = vadd.f32 %v474, %v670
    %v672 = vpop.f32.mrb[0].mxu0
    %v673 = vpop.f32.mrb[0].mxu0
    %v674 = vadd.f32 %v474, %v673
    %v675 = vpop.f32.mrb[0].mxu0
    %676 = vmatprep.mubr.bf16.mxu0 0
    %677 = vmatmul.mubr.bf16.gmra.mrb[0].mxu0 %v466
    %v678 = vpop.f32.mrb[0].mxu0
    %v679 = vadd.f32 %v474, %v678
    %v680 = vpop.f32.mrb[0].mxu0
    %v681 = vpop.f32.mrb[0].mxu0
    %v682 = vadd.f32 %v474, %v681
    %v683 = vpop.f32.mrb[0].mxu0
    %684 = vmatprep.mubr.bf16.mxu0 0
    %685 = vmatmul.mubr.bf16.gmra.mrb[0].mxu0 %v467
    %v686 = vpop.f32.mrb[0].mxu0
    %v687 = vadd.f32 %v474, %v686
    %v688 = vpop.f32.mrb[0].mxu0
    %v689 = vpop.f32.mrb[0].mxu0
    %v690 = vadd.f32 %v474, %v689
    %v691 = vpop.f32.mrb[0].mxu0
    %692 = vmatprep.mubr.bf16.mxu0 0
    %693 = vmatmul.mubr.bf16.gmra.mrb[0].mxu0 %v468
    %v694 = vpop.f32.mrb[0].mxu0
    %v695 = vadd.f32 %v474, %v694
    %v696 = vpop.f32.mrb[0].mxu0
    %v697 = vpop.f32.mrb[0].mxu0
    %v698 = vadd.f32 %v474, %v697
    %v699 = vpop.f32.mrb[0].mxu0
    %700 = vmatprep.mubr.bf16.mxu0 0
    %701 = vmatmul.mubr.bf16.gmra.mrb[0].mxu0 %v469
    %v702 = vpop.f32.mrb[0].mxu0
    %v703 = vadd.f32 %v474, %v702
    %v704 = vpop.f32.mrb[0].mxu0
    %v705 = vpop.f32.mrb[0].mxu0
    %v706 = vadd.f32 %v474, %v705
    %v707 = vpop.f32.mrb[0].mxu0
    %708 = vdwg.mxu0
    %v709 = vmax.f32 %v559, 0.0
    %v710 = vmax.f32 %v562, 0.0
    %v711 = vmax.f32 %v567, 0.0
    %v712 = vmax.f32 %v570, 0.0
    %v713 = vmax.f32 %v575, 0.0
    %v714 = vmax.f32 %v578, 0.0
    %v715 = vmax.f32 %v583, 0.0
    %v716 = vmax.f32 %v586, 0.0
    %v717 = vmax.f32 %v591, 0.0
    %v718 = vmax.f32 %v594, 0.0
    %v719 = vmax.f32 %v599, 0.0
    %v720 = vmax.f32 %v602, 0.0
    %v721 = vmax.f32 %v607, 0.0
    %v722 = vmax.f32 %v610, 0.0
    %v723 = vmax.f32 %v615, 0.0
    %v724 = vmax.f32 %v618, 0.0
    %v725 = vmax.f32 %v623, 0.0
    %v726 = vmax.f32 %v626, 0.0
    %v727 = vmax.f32 %v631, 0.0
    %v728 = vmax.f32 %v634, 0.0
    %v729 = vmax.f32 %v639, 0.0
    %v730 = vmax.f32 %v642, 0.0
    %v731 = vmax.f32 %v647, 0.0
    %v732 = vmax.f32 %v650, 0.0
    %v733 = vmax.f32 %v655, 0.0
    %v734 = vmax.f32 %v658, 0.0
    %v735 = vmax.f32 %v663, 0.0
    %v736 = vmax.f32 %v666, 0.0
    %v737 = vmax.f32 %v671, 0.0
    %v738 = vmax.f32 %v674, 0.0
    %v739 = vmax.f32 %v679, 0.0
    %v740 = vmax.f32 %v682, 0.0
    %v741 = vmax.f32 %v687, 0.0
    %v742 = vmax.f32 %v690, 0.0
    %v743 = vmax.f32 %v695, 0.0
    %v744 = vmax.f32 %v698, 0.0
    %v745 = vmax.f32 %v703, 0.0
    %v746 = vmax.f32 %v706, 0.0
    %v747 = vld [vmem:[#allocation8] sm:$0xf]
    %v748 = vld [vmem:[#allocation8 + $0x4] sm:$0xf]
    %v749 = vld [vmem:[#allocation8 + $0x8] sm:$0xf]
    %v750 = vld [vmem:[#allocation8 + $0xc] sm:$0xf]
    %v751 = vld [vmem:[#allocation8 + $0x10] sm:$0xf]
    %v752 = vld [vmem:[#allocation8 + $0x14] sm:$0xf]
    %v753 = vld [vmem:[#allocation8 + $0x18] sm:$0xf]
    %v754 = vld [vmem:[#allocation8 + $0x1c] sm:$0xf]
    %v755 = vld [vmem:[#allocation8 + $0x20] sm:$0xf]
    %v756 = vld [vmem:[#allocation8 + $0x24] sm:$0xf]
    %v757 = vld [vmem:[#allocation8 + $0x28] sm:$0xf]
    %v758 = vld [vmem:[#allocation8 + $0x2c] sm:$0xf]
    %v759 = vld [vmem:[#allocation8 + $0x30] sm:$0xf]
    %v760 = vld [vmem:[#allocation8 + $0x34] sm:$0xf]
    %v761 = vld [vmem:[#allocation8 + $0x38] sm:$0xf]
    %v762 = vld [vmem:[#allocation8 + $0x3c] sm:$0xf]
    %v763 = vld [vmem:[%s6] sm:$0x1]
    %v764 = vpack.c.bf16 %v710, %v709
    %v765 = vpack.c.bf16 %v712, %v711
    %v766 = vpack.c.bf16 %v714, %v713
    %v767 = vpack.c.bf16 %v716, %v715
    %v768 = vpack.c.bf16 %v718, %v717
    %v769 = vpack.c.bf16 %v720, %v719
    %v770 = vpack.c.bf16 %v722, %v721
    %v771 = vpack.c.bf16 %v724, %v723
    %v772 = vpack.c.bf16 %v726, %v725
    %v773 = vpack.c.bf16 %v728, %v727
    %v774 = vpack.c.bf16 %v730, %v729
    %v775 = vpack.c.bf16 %v732, %v731
    %v776 = vpack.c.bf16 %v734, %v733
    %v777 = vpack.c.bf16 %v736, %v735
    %v778 = vpack.c.bf16 %v738, %v737
    %v779 = vpack.c.bf16 %v740, %v739
    %v780 = vpack.c.bf16 %v742, %v741
    %v781 = vpack.c.bf16 %v744, %v743
    %v782 = vpack.c.bf16 %v746, %v745
    %v784 = vlaneseq
    %v785 = vshrl.u32 %v784, 7
    %v786 = vsub.s32 0, %v785
    %v787 = vrot.slane %v763, %v786
    %v805 = vunpack.c.l.b16 %v747
    %v806 = vunpack.c.l.b16 %v748
    %v807 = vunpack.c.l.b16 %v749
    %v808 = vunpack.c.l.b16 %v750
    %v809 = vunpack.c.l.b16 %v751
    %v810 = vunpack.c.l.b16 %v752
    %v811 = vunpack.c.l.b16 %v753
    %v812 = vunpack.c.l.b16 %v754
    %v813 = vunpack.c.l.b16 %v755
    %v814 = vunpack.c.l.b16 %v756
    %v815 = vunpack.c.l.b16 %v757
    %v816 = vunpack.c.l.b16 %v758
    %v817 = vunpack.c.l.b16 %v759
    %v818 = vunpack.c.l.b16 %v760
    %v819 = vunpack.c.l.b16 %v761
    %v820 = vunpack.c.l.b16 %v762
    %v821 = vpack.c.b16 %v806, %v805
    %v822 = vpack.c.b16 %v808, %v807
    %v823 = vpack.c.b16 %v810, %v809
    %v824 = vpack.c.b16 %v812, %v811
    %v825 = vpack.c.b16 %v814, %v813
    %v826 = vpack.c.b16 %v816, %v815
    %v827 = vpack.c.b16 %v818, %v817
    %v828 = vpack.c.b16 %v820, %v819
    %837 = vmatprep.subr.bf16.mxu0 0
    %838 = vmatpush1.bf16.msra.mxu0 %v821
    %839 = vmatprep.subr.bf16.mxu0 0
    %840 = vmatpush1.bf16.msra.mxu0 %v822
    %841 = vmatprep.subr.bf16.mxu0 0
    %842 = vmatpush1.bf16.msra.mxu0 %v823
    %843 = vmatprep.subr.bf16.mxu0 0
    %844 = vmatpush1.bf16.msra.mxu0 %v824
    %845 = vmatprep.subr.bf16.mxu0 0
    %846 = vmatpush1.bf16.msra.mxu0 %v825
    %847 = vmatprep.subr.bf16.mxu0 0
    %848 = vmatpush1.bf16.msra.mxu0 %v826
    %849 = vmatprep.subr.bf16.mxu0 0
    %850 = vmatpush1.bf16.msra.mxu0 %v827
    %851 = vmatprep.subr.bf16.mxu0 0
    %852 = vmatpush1.bf16.msra.mxu0 %v828
    %853 = vmatprep.subr.bf16.mxu0 0
    %854 = vmatpush1.bf16.msra.mxu0 0
    %855 = vmatprep.subr.bf16.mxu0 0
    %856 = vmatpush1.bf16.msra.mxu0 0
    %857 = vmatprep.subr.bf16.mxu0 0
    %858 = vmatpush1.bf16.msra.mxu0 0
    %859 = vmatprep.subr.bf16.mxu0 0
    %860 = vmatpush1.bf16.msra.mxu0 0
    %861 = vmatprep.subr.bf16.mxu0 0
    %862 = vmatpush1.bf16.msra.mxu0 0
    %863 = vmatprep.subr.bf16.mxu0 0
    %864 = vmatpush1.bf16.msra.mxu0 0
    %865 = vmatprep.subr.bf16.mxu0 0
    %866 = vmatpush1.bf16.msra.mxu0 0
    %867 = vmatprep.subr.bf16.mxu0 0
    %868 = vmatpush1.bf16.msra.mxu0 0
    %869 = vmatprep.mubr.bf16.mxu0 0
    %870 = vmatmul.mubr.bf16.gmra.mrb[0].mxu0 %v764
    %v871 = vpop.f32.mrb[0].mxu0
    %v872 = vadd.f32 %v787, %v871
    %v873 = vpop.f32.mrb[0].mxu0
    %v874 = vpop.f32.mrb[0].mxu0
    %v875 = vadd.f32 %v787, %v874
    %v876 = vpop.f32.mrb[0].mxu0
    %877 = vmatprep.mubr.bf16.mxu0 0
    %878 = vmatmul.mubr.bf16.gmra.mrb[0].mxu0 %v765
    %v879 = vpop.f32.mrb[0].mxu0
    %v880 = vadd.f32 %v787, %v879
    %v881 = vpop.f32.mrb[0].mxu0
    %v882 = vpop.f32.mrb[0].mxu0
    %v883 = vadd.f32 %v787, %v882
    %v884 = vpop.f32.mrb[0].mxu0
    %885 = vmatprep.mubr.bf16.mxu0 0
    %886 = vmatmul.mubr.bf16.gmra.mrb[0].mxu0 %v766
    %v887 = vpop.f32.mrb[0].mxu0
    %v888 = vadd.f32 %v787, %v887
    %v889 = vpop.f32.mrb[0].mxu0
    %v890 = vpop.f32.mrb[0].mxu0
    %v891 = vadd.f32 %v787, %v890
    %v892 = vpop.f32.mrb[0].mxu0
    %893 = vmatprep.mubr.bf16.mxu0 0
    %894 = vmatmul.mubr.bf16.gmra.mrb[0].mxu0 %v767
    %v895 = vpop.f32.mrb[0].mxu0
    %v896 = vadd.f32 %v787, %v895
    %v897 = vpop.f32.mrb[0].mxu0
    %v898 = vpop.f32.mrb[0].mxu0
    %v899 = vadd.f32 %v787, %v898
    %v900 = vpop.f32.mrb[0].mxu0
    %901 = vmatprep.mubr.bf16.mxu0 0
    %902 = vmatmul.mubr.bf16.gmra.mrb[0].mxu0 %v768
    %v903 = vpop.f32.mrb[0].mxu0
    %v904 = vadd.f32 %v787, %v903
    %v905 = vpop.f32.mrb[0].mxu0
    %v906 = vpop.f32.mrb[0].mxu0
    %v907 = vadd.f32 %v787, %v906
    %v908 = vpop.f32.mrb[0].mxu0
    %909 = vmatprep.mubr.bf16.mxu0 0
    %910 = vmatmul.mubr.bf16.gmra.mrb[0].mxu0 %v769
    %v911 = vpop.f32.mrb[0].mxu0
    %v912 = vadd.f32 %v787, %v911
    %v913 = vpop.f32.mrb[0].mxu0
    %v914 = vpop.f32.mrb[0].mxu0
    %v915 = vadd.f32 %v787, %v914
    %v916 = vpop.f32.mrb[0].mxu0
    %917 = vmatprep.mubr.bf16.mxu0 0
    %918 = vmatmul.mubr.bf16.gmra.mrb[0].mxu0 %v770
    %v919 = vpop.f32.mrb[0].mxu0
    %v920 = vadd.f32 %v787, %v919
    %v921 = vpop.f32.mrb[0].mxu0
    %v922 = vpop.f32.mrb[0].mxu0
    %v923 = vadd.f32 %v787, %v922
    %v924 = vpop.f32.mrb[0].mxu0
    %925 = vmatprep.mubr.bf16.mxu0 0
    %926 = vmatmul.mubr.bf16.gmra.mrb[0].mxu0 %v771
    %v927 = vpop.f32.mrb[0].mxu0
    %v928 = vadd.f32 %v787, %v927
    %v929 = vpop.f32.mrb[0].mxu0
    %v930 = vpop.f32.mrb[0].mxu0
    %v931 = vadd.f32 %v787, %v930
    %v932 = vpop.f32.mrb[0].mxu0
    %933 = vmatprep.mubr.bf16.mxu0 0
    %934 = vmatmul.mubr.bf16.gmra.mrb[0].mxu0 %v772
    %v935 = vpop.f32.mrb[0].mxu0
    %v936 = vadd.f32 %v787, %v935
    %v937 = vpop.f32.mrb[0].mxu0
    %v938 = vpop.f32.mrb[0].mxu0
    %v939 = vadd.f32 %v787, %v938
    %v940 = vpop.f32.mrb[0].mxu0
    %941 = vmatprep.mubr.bf16.mxu0 0
    %942 = vmatmul.mubr.bf16.gmra.mrb[0].mxu0 %v773
    %v943 = vpop.f32.mrb[0].mxu0
    %v944 = vadd.f32 %v787, %v943
    %v945 = vpop.f32.mrb[0].mxu0
    %v946 = vpop.f32.mrb[0].mxu0
    %v947 = vadd.f32 %v787, %v946
    %v948 = vpop.f32.mrb[0].mxu0
    %949 = vmatprep.mubr.bf16.mxu0 0
    %950 = vmatmul.mubr.bf16.gmra.mrb[0].mxu0 %v774
    %v951 = vpop.f32.mrb[0].mxu0
    %v952 = vadd.f32 %v787, %v951
    %v953 = vpop.f32.mrb[0].mxu0
    %v954 = vpop.f32.mrb[0].mxu0
    %v955 = vadd.f32 %v787, %v954
    %v956 = vpop.f32.mrb[0].mxu0
    %957 = vmatprep.mubr.bf16.mxu0 0
    %958 = vmatmul.mubr.bf16.gmra.mrb[0].mxu0 %v775
    %v959 = vpop.f32.mrb[0].mxu0
    %v960 = vadd.f32 %v787, %v959
    %v961 = vpop.f32.mrb[0].mxu0
    %v962 = vpop.f32.mrb[0].mxu0
    %v963 = vadd.f32 %v787, %v962
    %v964 = vpop.f32.mrb[0].mxu0
    %965 = vmatprep.mubr.bf16.mxu0 0
    %966 = vmatmul.mubr.bf16.gmra.mrb[0].mxu0 %v776
    %v967 = vpop.f32.mrb[0].mxu0
    %v968 = vadd.f32 %v787, %v967
    %v969 = vpop.f32.mrb[0].mxu0
    %v970 = vpop.f32.mrb[0].mxu0
    %v971 = vadd.f32 %v787, %v970
    %v972 = vpop.f32.mrb[0].mxu0
    %973 = vmatprep.mubr.bf16.mxu0 0
    %974 = vmatmul.mubr.bf16.gmra.mrb[0].mxu0 %v777
    %v975 = vpop.f32.mrb[0].mxu0
    %v976 = vadd.f32 %v787, %v975
    %v977 = vpop.f32.mrb[0].mxu0
    %v978 = vpop.f32.mrb[0].mxu0
    %v979 = vadd.f32 %v787, %v978
    %v980 = vpop.f32.mrb[0].mxu0
    %981 = vmatprep.mubr.bf16.mxu0 0
    %982 = vmatmul.mubr.bf16.gmra.mrb[0].mxu0 %v778
    %v983 = vpop.f32.mrb[0].mxu0
    %v984 = vadd.f32 %v787, %v983
    %v985 = vpop.f32.mrb[0].mxu0
    %v986 = vpop.f32.mrb[0].mxu0
    %v987 = vadd.f32 %v787, %v986
    %v988 = vpop.f32.mrb[0].mxu0
    %989 = vmatprep.mubr.bf16.mxu0 0
    %990 = vmatmul.mubr.bf16.gmra.mrb[0].mxu0 %v779
    %v991 = vpop.f32.mrb[0].mxu0
    %v992 = vadd.f32 %v787, %v991
    %v993 = vpop.f32.mrb[0].mxu0
    %v994 = vpop.f32.mrb[0].mxu0
    %v995 = vadd.f32 %v787, %v994
    %v996 = vpop.f32.mrb[0].mxu0
    %997 = vmatprep.mubr.bf16.mxu0 0
    %998 = vmatmul.mubr.bf16.gmra.mrb[0].mxu0 %v780
    %v999 = vpop.f32.mrb[0].mxu0
    %v1000 = vadd.f32 %v787, %v999
    %v1001 = vpop.f32.mrb[0].mxu0
    %v1002 = vpop.f32.mrb[0].mxu0
    %v1003 = vadd.f32 %v787, %v1002
    %v1004 = vpop.f32.mrb[0].mxu0
    %1005 = vmatprep.mubr.bf16.mxu0 0
    %1006 = vmatmul.mubr.bf16.gmra.mrb[0].mxu0 %v781
    %v1007 = vpop.f32.mrb[0].mxu0
    %v1008 = vadd.f32 %v787, %v1007
    %v1009 = vpop.f32.mrb[0].mxu0
    %v1010 = vpop.f32.mrb[0].mxu0
    %v1011 = vadd.f32 %v787, %v1010
    %v1012 = vpop.f32.mrb[0].mxu0
    %1013 = vmatprep.mubr.bf16.mxu0 0
    %1014 = vmatmul.mubr.bf16.gmra.mrb[0].mxu0 %v782
    %v1015 = vpop.f32.mrb[0].mxu0
    %v1016 = vadd.f32 %v787, %v1015
    %v1017 = vpop.f32.mrb[0].mxu0
    %v1018 = vpop.f32.mrb[0].mxu0
    %v1019 = vadd.f32 %v787, %v1018
    %v1020 = vpop.f32.mrb[0].mxu0
    %1021 = vdwg.mxu0
    %v1022 = vmax.f32 %v872, 0.0
    %v1023 = vmax.f32 %v875, 0.0
    %v1024 = vmax.f32 %v880, 0.0
    %v1025 = vmax.f32 %v883, 0.0
    %v1026 = vmax.f32 %v888, 0.0
    %v1027 = vmax.f32 %v891, 0.0
    %v1028 = vmax.f32 %v896, 0.0
    %v1029 = vmax.f32 %v899, 0.0
    %v1030 = vmax.f32 %v904, 0.0
    %v1031 = vmax.f32 %v907, 0.0
    %v1032 = vmax.f32 %v912, 0.0
    %v1033 = vmax.f32 %v915, 0.0
    %v1034 = vmax.f32 %v920, 0.0
    %v1035 = vmax.f32 %v923, 0.0
    %v1036 = vmax.f32 %v928, 0.0
    %v1037 = vmax.f32 %v931, 0.0
    %v1038 = vmax.f32 %v936, 0.0
    %v1039 = vmax.f32 %v939, 0.0
    %v1040 = vmax.f32 %v944, 0.0
    %v1041 = vmax.f32 %v947, 0.0
    %v1042 = vmax.f32 %v952, 0.0
    %v1043 = vmax.f32 %v955, 0.0
    %v1044 = vmax.f32 %v960, 0.0
    %v1045 = vmax.f32 %v963, 0.0
    %v1046 = vmax.f32 %v968, 0.0
    %v1047 = vmax.f32 %v971, 0.0
    %v1048 = vmax.f32 %v976, 0.0
    %v1049 = vmax.f32 %v979, 0.0
    %v1050 = vmax.f32 %v984, 0.0
    %v1051 = vmax.f32 %v987, 0.0
    %v1052 = vmax.f32 %v992, 0.0
    %v1053 = vmax.f32 %v995, 0.0
    %v1054 = vmax.f32 %v1000, 0.0
    %v1055 = vmax.f32 %v1003, 0.0
    %v1056 = vmax.f32 %v1008, 0.0
    %v1057 = vmax.f32 %v1011, 0.0
    %v1058 = vmax.f32 %v1016, 0.0
    %v1059 = vmax.f32 %v1019, 0.0
    %1060 = vst [vmem:[#allocation10] sm:$0xff] %v1022
    %1061 = vst [vmem:[#allocation10 + $0x8] sm:$0xff] %v1023
    %1062 = vst [vmem:[#allocation10 + $0x10] sm:$0xff] %v1024
    %1063 = vst [vmem:[#allocation10 + $0x18] sm:$0xff] %v1025
    %1064 = vst [vmem:[#allocation10 + $0x20] sm:$0xff] %v1026
    %1065 = vst [vmem:[#allocation10 + $0x28] sm:$0xff] %v1027
    %1066 = vst [vmem:[#allocation10 + $0x30] sm:$0xff] %v1028
    %1067 = vst [vmem:[#allocation10 + $0x38] sm:$0xff] %v1029
    %1068 = vst [vmem:[#allocation10 + $0x40] sm:$0xff] %v1030
    %1069 = vst [vmem:[#allocation10 + $0x48] sm:$0xff] %v1031
    %1070 = vst [vmem:[#allocation10 + $0x50] sm:$0xff] %v1032
    %1071 = vst [vmem:[#allocation10 + $0x58] sm:$0xff] %v1033
    %1072 = vst [vmem:[#allocation10 + $0x60] sm:$0xff] %v1034
    %1073 = vst [vmem:[#allocation10 + $0x68] sm:$0xff] %v1035
    %1074 = vst [vmem:[#allocation10 + $0x70] sm:$0xff] %v1036
    %1075 = vst [vmem:[#allocation10 + $0x78] sm:$0xff] %v1037
    %1076 = vst [vmem:[#allocation10 + $0x80] sm:$0xff] %v1038
    %1077 = vst [vmem:[#allocation10 + $0x88] sm:$0xff] %v1039
    %1078 = vst [vmem:[#allocation10 + $0x90] sm:$0xff] %v1040
    %1079 = vst [vmem:[#allocation10 + $0x98] sm:$0xff] %v1041
    %1080 = vst [vmem:[#allocation10 + $0xa0] sm:$0xff] %v1042
    %1081 = vst [vmem:[#allocation10 + $0xa8] sm:$0xff] %v1043
    %1082 = vst [vmem:[#allocation10 + $0xb0] sm:$0xff] %v1044
    %1083 = vst [vmem:[#allocation10 + $0xb8] sm:$0xff] %v1045
    %1084 = vst [vmem:[#allocation10 + $0xc0] sm:$0xff] %v1046
    %1085 = vst [vmem:[#allocation10 + $0xc8] sm:$0xff] %v1047
    %1086 = vst [vmem:[#allocation10 + $0xd0] sm:$0xff] %v1048
    %1087 = vst [vmem:[#allocation10 + $0xd8] sm:$0xff] %v1049
    %1088 = vst [vmem:[#allocation10 + $0xe0] sm:$0xff] %v1050
    %1089 = vst [vmem:[#allocation10 + $0xe8] sm:$0xff] %v1051
    %1090 = vst [vmem:[#allocation10 + $0xf0] sm:$0xff] %v1052
    %1091 = vst [vmem:[#allocation10 + $0xf8] sm:$0xff] %v1053
    %1092 = vst [vmem:[#allocation10 + $0x100] sm:$0xff] %v1054
    %1093 = vst [vmem:[#allocation10 + $0x108] sm:$0xff] %v1055
    %1094 = vst [vmem:[#allocation10 + $0x110] sm:$0xff] %v1056
    %1095 = vst [vmem:[#allocation10 + $0x118] sm:$0xff] %v1057
    %1096 = vst [vmem:[#allocation10 + $0x120] sm:$0xff] %v1058
    %1097 = vst [vmem:[#allocation10 + $0x128] sm:$0xff] %v1059
    // Predicated region
    $region46: #{tpu_custom_call.1} parent=1 // pred_check
      _
    $region47: #{tpu_custom_call.1} parent=1 // pred_check_branch
      %1099 = sbr.rel (0) target = $region49
    $region48: #{tpu_custom_call.1} parent=1 // pred_region
      %s1101 = ssub.s32 4864, 4864
      %1102 = vsyncadd [#allocation4], %s1101
      %s1103 = sshll.u32 [#allocation10], 4
      %s1104 = int_to_ptr.vmem [resolvable:$true] %s1103
      %1109 = dma.vmem_to_hbm [thread:$0]  %s1104, 4864, %s7, [#allocation4], 128, 128, 8
    $region49: #{tpu_custom_call.1} parent=1 // pred_fallthru
      _
    // Predicated region
    $region50: #{tpu_custom_call.1} parent=1 // pred_check
      _
    $region51: #{tpu_custom_call.1} parent=1 // pred_check_branch
      %1111 = sbr.rel (0) target = $region53
    $region52: #{tpu_custom_call.1} parent=1 // pred_region
      %1112 = dma.done [#allocation4], 4864
    $region53: #{tpu_custom_call.1} parent=1 // pred_fallthru
      _
    %1113 = vsyncpa [#allocation3], 1
    %1114 = vsyncpa [#allocation6], 1
    %1115 = vsyncpa [#allocation9], 1
    %1116 = vsyncpa [#allocation4], 1

</llo_original>
